<compile_context>
chip_gen: v7x
topology: tpu7x:2x2x1
jax: 0.10.0
libtpu: 0.0.40
codegen_flags: <defaults>
</compile_context>

<pallas_src>
import jax
import jax.numpy as jnp
from jax.experimental import pallas as pl
from jax.experimental.pallas import tpu as pltpu

BN_EPS = 1e-5


# --------------------------------------------------------------------------
# Stage 1 kernel factory: point-wise MLP (conv1/conv2 + folded BN + ReLU,
# conv3 with deferred bias/ReLU) and the global max-pool over points,
# accumulated across N-tiles in an (8, 1024) VMEM scratch.
# --------------------------------------------------------------------------
def _make_point_mlp_kernel(n_points, tile_n, num_tiles, pad_needed):
    def kernel(x_ref,
               w1_ref, b1_ref,
               w2_ref, b2_ref,
               w3_ref, b3_ref,
               g_ref, acc_ref):
        n = pl.program_id(1)                      # N-tile index (reduction axis, last)

        # Native Conv1d layout tile (k, TN) f32: transpose in-kernel, cast to bf16.
        x = jnp.transpose(x_ref[0], (1, 0)).astype(jnp.bfloat16)          # (TN, k)

        h = jnp.dot(x, w1_ref[...], preferred_element_type=jnp.float32) + b1_ref[...]
        h = jnp.maximum(h, 0.0)                                           # (TN, 64)
        h = jnp.dot(h.astype(jnp.bfloat16), w2_ref[...],
                    preferred_element_type=jnp.float32) + b2_ref[...]
        h = jnp.maximum(h, 0.0)                                           # (TN, 128)
        # conv3: bias + ReLU deferred to after the global max (exact rewrite:
        # per-column constant bias, monotone ReLU).
        h = jnp.dot(h.astype(jnp.bfloat16), w3_ref[...],
                    preferred_element_type=jnp.float32)                   # (TN, 1024)

        if pad_needed:
            # Mask zero-padded points to -inf so they never win the max.
            row = jax.lax.broadcasted_iota(jnp.int32, (tile_n, 1), 0)
            valid = (n * tile_n + row) < n_points
            h = jnp.where(valid, h, -jnp.inf)

        # Fold TN rows down to 8 sublanes with VPU-only vmax (sublane-aligned
        # split); the single cross-sublane XLU reduce happens only at the end.
        folded = jnp.max(h.reshape(tile_n // 8, 8, 1024), axis=0)         # (8, 1024)

        @pl.when(n == 0)
        def _():
            acc_ref[...] = folded

        @pl.when(n > 0)
        def _():
            acc_ref[...] = jnp.maximum(acc_ref[...], folded)

        @pl.when(n == num_tiles - 1)
        def _():
            gmax = jnp.max(acc_ref[...], axis=0, keepdims=True)           # (1, 1024)
            g_ref[0] = jnp.maximum(gmax + b3_ref[...], 0.0).astype(jnp.bfloat16)

    return kernel


# --------------------------------------------------------------------------
# Stage 2: FC head (fc1/fc2 + folded BN + ReLU, fc3 + identity folded into its
# bias), run once over the whole batch so M = B on the MXU.  g arrives in bf16.
# --------------------------------------------------------------------------
def fc_head_kernel(g_ref,
                   wf1_ref, bf1_ref,
                   wf2_ref, bf2_ref,
                   wf3_ref, bf3_ref,
                   out_ref):
    g = g_ref[...]                                                        # (B, 1024) bf16
    f = jnp.dot(g, wf1_ref[...], preferred_element_type=jnp.float32) + bf1_ref[...]
    f = jnp.maximum(f, 0.0)                                               # (B, 512)
    f = jnp.dot(f.astype(jnp.bfloat16), wf2_ref[...],
                preferred_element_type=jnp.float32) + bf2_ref[...]
    f = jnp.maximum(f, 0.0)                                               # (B, 256)
    out_ref[...] = (jnp.dot(f.astype(jnp.bfloat16), wf3_ref[...],
                            preferred_element_type=jnp.float32)
                    + bf3_ref[...])                                       # (B, k*k)


# --------------------------------------------------------------------------
# Plain-JAX glue: BN folding, tiling, parameter setup, wrapper.
# --------------------------------------------------------------------------
def _fold_bn(w, conv_b, gamma, beta, mean, var):
    """Fold inference-mode BN into a (Cin, Cout) weight and a (1, Cout) shift."""
    scale = gamma / jnp.sqrt(var + BN_EPS)
    w_eff = w * scale[None, :]
    b_eff = (conv_b - mean) * scale + beta
    return w_eff, b_eff[None, :]


def _choose_point_tile(n_points, max_tile=2048):
    """(TN, NT): TN multiple of 8 (and of 128 when tiled); pad N up to TN*NT.

    max_tile=2048 keeps stage-1 VMEM (~12-20 MiB) under the 32 MiB scoped
    limit, which is safe on v7x's 64 MiB physical VMEM as well as v5e/v6e.
    """
    if n_points <= max_tile:
        tn = -(-n_points // 8) * 8           # round up to sublane multiple
        return tn, 1
    nt = -(-n_points // max_tile)
    return max_tile, nt


def init_params(key, k):
    """Deterministic synthetic parameters with the same shapes as STNkd.__init__."""
    keys = jax.random.split(key, 32)
    idx = iter(range(32))

    def rnd(shape, scale=0.05):
        return scale * jax.random.normal(keys[next(idx)], shape, dtype=jnp.float32)

    p = {}
    # conv / fc weights stored transposed: (Cin, Cout)
    p["w1"], p["cb1"] = rnd((k, 64)), rnd((64,))
    p["w2"], p["cb2"] = rnd((64, 128)), rnd((128,))
    p["w3"], p["cb3"] = rnd((128, 1024)), rnd((1024,))
    p["wf1"], p["fb1"] = rnd((1024, 512)), rnd((512,))
    p["wf2"], p["fb2"] = rnd((512, 256)), rnd((256,))
    p["wf3"], p["fb3"] = rnd((256, k * k)), rnd((k * k,))
    # BN params (inference mode: running_mean=0, running_var=1)
    # TODO(synk): training-mode BatchNorm (per-batch statistics) is not modeled here.
    for name, c in (("bn1", 64), ("bn2", 128), ("bn3", 1024), ("bn4", 512), ("bn5", 256)):
        p[name] = dict(
            gamma=1.0 + rnd((c,), 0.02),
            beta=rnd((c,), 0.02),
            mean=jnp.zeros((c,), jnp.float32),
            var=jnp.ones((c,), jnp.float32),
        )
    return p


def stnkd_forward(x_bkn, params, k):
    """x_bkn: (B, k, N) float32, PyTorch Conv1d layout. Returns (B, k, k) float32."""
    B, kin, N = x_bkn.shape
    assert kin == k

    # Fold inference-mode BN (+ conv/fc biases) into effective weights & shifts.
    w1, b1 = _fold_bn(params["w1"], params["cb1"], **params["bn1"])
    w2, b2 = _fold_bn(params["w2"], params["cb2"], **params["bn2"])
    w3, b3 = _fold_bn(params["w3"], params["cb3"], **params["bn3"])
    wf1, bf1 = _fold_bn(params["wf1"], params["fb1"], **params["bn4"])
    wf2, bf2 = _fold_bn(params["wf2"], params["fb2"], **params["bn5"])
    wf3 = params["wf3"]
    # Fold the flattened identity directly into the last FC bias.
    bf3 = params["fb3"][None, :] + jnp.eye(k, dtype=jnp.float32).reshape(1, k * k)

    # bf16 weights for the MXU; biases stay f32 (added post-accumulation).
    w1, w2, w3, wf1, wf2, wf3 = (a.astype(jnp.bfloat16)
                                 for a in (w1, w2, w3, wf1, wf2, wf3))

    TN, NT = _choose_point_tile(N)
    N_pad = TN * NT
    pad_needed = N_pad != N
    x_in = x_bkn if not pad_needed else jnp.pad(
        x_bkn, ((0, 0), (0, 0), (0, N_pad - N)))

    def wspec(arr):
        # Whole (small) parameter array resident in VMEM every grid step.
        return pl.BlockSpec(arr.shape, lambda b, n, _nd=arr.ndim: (0,) * _nd)

    pm_weights = (w1, b1, w2, b2, w3, b3)
    flops_pm = int(2 * B * N_pad * (k * 64 + 64 * 128 + 128 * 1024))
    bytes_pm = int(x_in.size * 4
                   + sum(a.size * a.dtype.itemsize for a in pm_weights)
                   + B * 1024 * 2)

    # ---- stage 1: point-wise MLP + global max over points ------------------
    # TODO(synk): v7x megacore fallback for B < 2 (split the N axis across the
    # two TensorCores into partial maxes) is not implemented here.
    point_kernel = _make_point_mlp_kernel(N, TN, NT, pad_needed)
    g3 = pl.pallas_call(
        point_kernel,
        out_shape=jax.ShapeDtypeStruct((B, 1, 1024), jnp.bfloat16),
        grid=(B, NT),
        in_specs=[pl.BlockSpec((1, k, TN), lambda b, n: (b, 0, n))]
                 + [wspec(w) for w in pm_weights],
        out_specs=pl.BlockSpec((1, 1, 1024), lambda b, n: (b, 0, 0)),
        scratch_shapes=[pltpu.VMEM((8, 1024), jnp.float32)],
        compiler_params=pltpu.CompilerParams(
            dimension_semantics=("parallel", "arbitrary"),
            vmem_limit_bytes=32 * 1024 * 1024),
        cost_estimate=pl.CostEstimate(
            flops=flops_pm, transcendentals=0, bytes_accessed=bytes_pm),
    )(x_in, *pm_weights)

    g = g3.reshape(B, 1024)          # unit-dim drop, metadata-only

    # ---- stage 2: FC head over the whole batch (M = B) ----------------------
    fc_weights = (wf1, bf1, wf2, bf2, wf3, bf3)
    flops_fc = int(2 * B * (1024 * 512 + 512 * 256 + 256 * k * k))
    bytes_fc = int(g.size * 2
                   + sum(a.size * a.dtype.itemsize for a in fc_weights)
                   + B * k * k * 4)

    out_flat = pl.pallas_call(
        fc_head_kernel,
        out_shape=jax.ShapeDtypeStruct((B, k * k), jnp.float32),
        in_specs=[pl.BlockSpec(memory_space=pltpu.MemorySpace.VMEM)] * 7,
        out_specs=pl.BlockSpec(memory_space=pltpu.MemorySpace.VMEM),
        cost_estimate=pl.CostEstimate(
            flops=flops_fc, transcendentals=0, bytes_accessed=bytes_fc),
    )(g, *fc_weights)

    return out_flat.reshape(B, k, k)


# --------------------------------------------------------------------------
# Pure-JAX reference (f32 everywhere) for a loose sanity check.
# --------------------------------------------------------------------------
def _reference_forward(x_bkn, params, k):
    x = jnp.transpose(x_bkn, (0, 2, 1)).astype(jnp.float32)         # (B, N, k)

    def bn(h, bnp):
        scale = bnp["gamma"] / jnp.sqrt(bnp["var"] + BN_EPS)
        return (h - bnp["mean"]) * scale + bnp["beta"]

    h = jax.nn.relu(bn(x @ params["w1"] + params["cb1"], params["bn1"]))
    h = jax.nn.relu(bn(h @ params["w2"] + params["cb2"], params["bn2"]))
    h = jax.nn.relu(bn(h @ params["w3"] + params["cb3"], params["bn3"]))
    g = jnp.max(h, axis=1)                                           # (B, 1024)
    f = jax.nn.relu(bn(g @ params["wf1"] + params["fb1"], params["bn4"]))
    f = jax.nn.relu(bn(f @ params["wf2"] + params["fb2"], params["bn5"]))
    o = f @ params["wf3"] + params["fb3"]
    o = o + jnp.eye(k, dtype=jnp.float32).reshape(1, k * k)
    return o.reshape(-1, k, k)


if __name__ == "__main__":
    B, K, N = 2, 16, 128   # small shapes: batch=2, k=16 features, 128 points
    key = jax.random.PRNGKey(0)
    pkey, xkey = jax.random.split(key)

    params = init_params(pkey, K)
    x = jax.random.normal(xkey, (B, K, N), dtype=jnp.float32)        # (B, k, N) like PyTorch

    out = stnkd_forward(x, params, K)
    out = jax.block_until_ready(out)
    assert out.shape == (B, K, K)
    assert out.dtype == jnp.float32

    ref = _reference_forward(x, params, K)
    max_err = float(jnp.max(jnp.abs(out - ref)))
    assert jnp.allclose(out, ref, rtol=5e-2, atol=5e-2), f"max abs err {max_err}"

    print("KERNEL_OK")
</pallas_src>

<mosaic_0001>
module attributes {stable_mosaic.version = 11 : i64} {
  func.func @kernel(%arg0: i32, %arg1: i32, %arg2: memref<1x16x128xf32, #tpu.memory_space<vmem>>, %arg3: memref<16x64xbf16, #tpu.memory_space<vmem>>, %arg4: memref<1x64xf32, #tpu.memory_space<vmem>>, %arg5: memref<64x128xbf16, #tpu.memory_space<vmem>>, %arg6: memref<1x128xf32, #tpu.memory_space<vmem>>, %arg7: memref<128x1024xbf16, #tpu.memory_space<vmem>>, %arg8: memref<1x1024xf32, #tpu.memory_space<vmem>>, %arg9: memref<1x1x1024xbf16, #tpu.memory_space<vmem>>, %arg10: memref<8x1024xf32, #tpu.memory_space<vmem>>) attributes {dimension_semantics = [#tpu.dimension_semantics<parallel>, #tpu.dimension_semantics<arbitrary>], iteration_bounds = array<i64: 2, 1>, scalar_prefetch = 0 : i64, scratch_operands = 1 : i64, tpu.core_type = #tpu.core_type<tc>, window_params = [{transform_indices = @transform_0, window_bounds = array<i64: 1, 16, 128>}, {pipeline_mode = #tpu.pipeline_mode<synchronous>, transform_indices = @transform_1, window_bounds = array<i64: 16, 64>}, {pipeline_mode = #tpu.pipeline_mode<synchronous>, transform_indices = @transform_2, window_bounds = array<i64: 1, 64>}, {pipeline_mode = #tpu.pipeline_mode<synchronous>, transform_indices = @transform_3, window_bounds = array<i64: 64, 128>}, {pipeline_mode = #tpu.pipeline_mode<synchronous>, transform_indices = @transform_4, window_bounds = array<i64: 1, 128>}, {pipeline_mode = #tpu.pipeline_mode<synchronous>, transform_indices = @transform_5, window_bounds = array<i64: 128, 1024>}, {pipeline_mode = #tpu.pipeline_mode<synchronous>, transform_indices = @transform_6, window_bounds = array<i64: 1, 1024>}, {transform_indices = @transform_7, window_bounds = array<i64: 1, 1, 1024>}]} {
    %c0 = arith.constant 0 : index
    %c0_0 = arith.constant 0 : index
    %c0_1 = arith.constant 0 : index
    %0 = vector.load %arg2[%c0, %c0_0, %c0_1] : memref<1x16x128xf32, #tpu.memory_space<vmem>>, vector<1x16x128xf32>
    %1 = vector.shape_cast %0 : vector<1x16x128xf32> to vector<16x128xf32>
    %2 = tpu.transpose %1, [1, 0] : vector<16x128xf32> -> vector<128x16xf32>
    %3 = arith.truncf %2 : vector<128x16xf32> to vector<128x16xbf16>
    %c0_2 = arith.constant 0 : index
    %c0_3 = arith.constant 0 : index
    %4 = vector.load %arg3[%c0_2, %c0_3] : memref<16x64xbf16, #tpu.memory_space<vmem>>, vector<16x64xbf16>
    %cst = arith.constant dense<0.000000e+00> : vector<128x64xf32>
    %5 = tpu.matmul %3, %4, %cst {dimension_numbers = #tpu.dot_dimension_numbers<[1], [0], [0], [1], [0, 0, 1, 1], [], []>} : vector<128x16xbf16>, vector<16x64xbf16>, vector<128x64xf32> -> vector<128x64xf32>
    %c0_4 = arith.constant 0 : index
    %c0_5 = arith.constant 0 : index
    %6 = vector.load %arg4[%c0_4, %c0_5] : memref<1x64xf32, #tpu.memory_space<vmem>>, vector<1x64xf32>
    %7 = vector.broadcast %6 : vector<1x64xf32> to vector<128x64xf32>
    %8 = arith.addf %5, %7 : vector<128x64xf32>
    %cst_6 = arith.constant 0.000000e+00 : f32
    %9 = vector.broadcast %cst_6 : f32 to vector<128x64xf32>
    %10 = arith.maximumf %8, %9 : vector<128x64xf32>
    %11 = arith.truncf %10 : vector<128x64xf32> to vector<128x64xbf16>
    %c0_7 = arith.constant 0 : index
    %c0_8 = arith.constant 0 : index
    %12 = vector.load %arg5[%c0_7, %c0_8] : memref<64x128xbf16, #tpu.memory_space<vmem>>, vector<64x128xbf16>
    %cst_9 = arith.constant dense<0.000000e+00> : vector<128x128xf32>
    %13 = tpu.matmul %11, %12, %cst_9 {dimension_numbers = #tpu.dot_dimension_numbers<[1], [0], [0], [1], [0, 0, 1, 1], [], []>} : vector<128x64xbf16>, vector<64x128xbf16>, vector<128x128xf32> -> vector<128x128xf32>
    %c0_10 = arith.constant 0 : index
    %c0_11 = arith.constant 0 : index
    %14 = vector.load %arg6[%c0_10, %c0_11] : memref<1x128xf32, #tpu.memory_space<vmem>>, vector<1x128xf32>
    %15 = vector.broadcast %14 : vector<1x128xf32> to vector<128x128xf32>
    %16 = arith.addf %13, %15 : vector<128x128xf32>
    %cst_12 = arith.constant 0.000000e+00 : f32
    %17 = vector.broadcast %cst_12 : f32 to vector<128x128xf32>
    %18 = arith.maximumf %16, %17 : vector<128x128xf32>
    %19 = arith.truncf %18 : vector<128x128xf32> to vector<128x128xbf16>
    %c0_13 = arith.constant 0 : index
    %c0_14 = arith.constant 0 : index
    %20 = vector.load %arg7[%c0_13, %c0_14] : memref<128x1024xbf16, #tpu.memory_space<vmem>>, vector<128x1024xbf16>
    %cst_15 = arith.constant dense<0.000000e+00> : vector<128x1024xf32>
    %21 = tpu.matmul %19, %20, %cst_15 {dimension_numbers = #tpu.dot_dimension_numbers<[1], [0], [0], [1], [0, 0, 1, 1], [], []>} : vector<128x128xbf16>, vector<128x1024xbf16>, vector<128x1024xf32> -> vector<128x1024xf32>
    %22 = vector.shape_cast %21 : vector<128x1024xf32> to vector<16x8x1024xf32>
    %cst_16 = arith.constant dense<0xFF800000> : vector<8x1024xf32>
    %23 = vector.multi_reduction <maximumf>, %22, %cst_16 [0] : vector<16x8x1024xf32> to vector<8x1024xf32>
    %c0_i32 = arith.constant 0 : i32
    %24 = arith.cmpi eq, %arg1, %c0_i32 : i32
    %25 = arith.extui %24 : i1 to i32
    %c0_i32_17 = arith.constant 0 : i32
    %26 = arith.cmpi ne, %25, %c0_i32_17 : i32
    scf.if %26 {
      %c0_22 = arith.constant 0 : index
      %c0_23 = arith.constant 0 : index
      %33 = vector.load %arg10[%c0_22, %c0_23] : memref<8x1024xf32, #tpu.memory_space<vmem>>, vector<8x1024xf32>
      tpu.vector_store %arg10[%c0_22, %c0_23], %23 {strides = array<i32>} : memref<8x1024xf32, #tpu.memory_space<vmem>>, vector<8x1024xf32>,
    } else {
    }
    %c0_i32_18 = arith.constant 0 : i32
    %27 = arith.cmpi sgt, %arg1, %c0_i32_18 : i32
    %28 = arith.extui %27 : i1 to i32
    %c0_i32_19 = arith.constant 0 : i32
    %29 = arith.cmpi ne, %28, %c0_i32_19 : i32
    scf.if %29 {
      %c0_22 = arith.constant 0 : index
      %c0_23 = arith.constant 0 : index
      %33 = vector.load %arg10[%c0_22, %c0_23] : memref<8x1024xf32, #tpu.memory_space<vmem>>, vector<8x1024xf32>
      %34 = arith.maximumf %33, %23 : vector<8x1024xf32>
      %c0_24 = arith.constant 0 : index
      %c0_25 = arith.constant 0 : index
      %35 = vector.load %arg10[%c0_24, %c0_25] : memref<8x1024xf32, #tpu.memory_space<vmem>>, vector<8x1024xf32>
      tpu.vector_store %arg10[%c0_24, %c0_25], %34 {strides = array<i32>} : memref<8x1024xf32, #tpu.memory_space<vmem>>, vector<8x1024xf32>,
    } else {
    }
    %c0_i32_20 = arith.constant 0 : i32
    %30 = arith.cmpi eq, %arg1, %c0_i32_20 : i32
    %31 = arith.extui %30 : i1 to i32
    %c0_i32_21 = arith.constant 0 : i32
    %32 = arith.cmpi ne, %31, %c0_i32_21 : i32
    scf.if %32 {
      %c0_22 = arith.constant 0 : index
      %c0_23 = arith.constant 0 : index
      %33 = vector.load %arg10[%c0_22, %c0_23] : memref<8x1024xf32, #tpu.memory_space<vmem>>, vector<8x1024xf32>
      %cst_24 = arith.constant dense<0xFF800000> : vector<1024xf32>
      %34 = vector.multi_reduction <maximumf>, %33, %cst_24 [0] : vector<8x1024xf32> to vector<1024xf32>
      %35 = vector.shape_cast %34 : vector<1024xf32> to vector<1x1024xf32>
      %c0_25 = arith.constant 0 : index
      %c0_26 = arith.constant 0 : index
      %36 = vector.load %arg8[%c0_25, %c0_26] : memref<1x1024xf32, #tpu.memory_space<vmem>>, vector<1x1024xf32>
      %37 = arith.addf %35, %36 : vector<1x1024xf32>
      %cst_27 = arith.constant 0.000000e+00 : f32
      %38 = vector.broadcast %cst_27 : f32 to vector<1x1024xf32>
      %39 = arith.maximumf %37, %38 : vector<1x1024xf32>
      %40 = arith.truncf %39 : vector<1x1024xf32> to vector<1x1024xbf16>
      %c0_28 = arith.constant 0 : index
      %c0_29 = arith.constant 0 : index
      %c0_30 = arith.constant 0 : index
      %41 = vector.load %arg9[%c0_28, %c0_29, %c0_30] : memref<1x1x1024xbf16, #tpu.memory_space<vmem>>, vector<1x1x1024xbf16>
      %42 = vector.shape_cast %41 : vector<1x1x1024xbf16> to vector<1x1024xbf16>
      %43 = vector.shape_cast %40 : vector<1x1024xbf16> to vector<1x1x1024xbf16>
      tpu.vector_store %arg9[%c0_28, %c0_29, %c0_30], %43 {strides = array<i32>} : memref<1x1x1024xbf16, #tpu.memory_space<vmem>>, vector<1x1x1024xbf16>,
    } else {
    }
    return
  }
  func.func @transform_0(%arg0: i32, %arg1: i32) -> (i32, i32, i32) {
    %c0_i32 = arith.constant 0 : i32
    %c0_i32_0 = arith.constant 0 : i32
    return %arg0, %c0_i32, %arg1 : i32, i32, i32
  }
  func.func @transform_1(%arg0: i32, %arg1: i32) -> (i32, i32) {
    %c0_i32 = arith.constant 0 : i32
    %c0_i32_0 = arith.constant 0 : i32
    %c0_i32_1 = arith.constant 0 : i32
    return %c0_i32, %c0_i32_0 : i32, i32
  }
  func.func @transform_2(%arg0: i32, %arg1: i32) -> (i32, i32) {
    %c0_i32 = arith.constant 0 : i32
    %c0_i32_0 = arith.constant 0 : i32
    %c0_i32_1 = arith.constant 0 : i32
    return %c0_i32, %c0_i32_0 : i32, i32
  }
  func.func @transform_3(%arg0: i32, %arg1: i32) -> (i32, i32) {
    %c0_i32 = arith.constant 0 : i32
    %c0_i32_0 = arith.constant 0 : i32
    %c0_i32_1 = arith.constant 0 : i32
    return %c0_i32, %c0_i32_0 : i32, i32
  }
  func.func @transform_4(%arg0: i32, %arg1: i32) -> (i32, i32) {
    %c0_i32 = arith.constant 0 : i32
    %c0_i32_0 = arith.constant 0 : i32
    %c0_i32_1 = arith.constant 0 : i32
    return %c0_i32, %c0_i32_0 : i32, i32
  }
  func.func @transform_5(%arg0: i32, %arg1: i32) -> (i32, i32) {
    %c0_i32 = arith.constant 0 : i32
    %c0_i32_0 = arith.constant 0 : i32
    %c0_i32_1 = arith.constant 0 : i32
    return %c0_i32, %c0_i32_0 : i32, i32
  }
  func.func @transform_6(%arg0: i32, %arg1: i32) -> (i32, i32) {
    %c0_i32 = arith.constant 0 : i32
    %c0_i32_0 = arith.constant 0 : i32
    %c0_i32_1 = arith.constant 0 : i32
    return %c0_i32, %c0_i32_0 : i32, i32
  }
  func.func @transform_7(%arg0: i32, %arg1: i32) -> (i32, i32, i32) {
    %c0_i32 = arith.constant 0 : i32
    %c0_i32_0 = arith.constant 0 : i32
    %c0_i32_1 = arith.constant 0 : i32
    return %arg0, %c0_i32, %c0_i32_0 : i32, i32, i32
  }
}

</mosaic_0001>

<llo_original>
// kernel: tpu_custom_call.1
$region0: #{tpu_custom_call.1}
  #allocation0 [shape = 'u32[]', space=smem, size = 0x4, offset = 0x4, fixed_abs, tag = 'smem constant byte address 0x4 - core index']
  #allocation1 [shape = 'u32[144,128]{1,0:T(1,128)}', space=vmem, size = 0x12000, scoped, tag = 'internal scratch']
  #allocation2 [shape = 'f32[8,1024]{1,0:T(8,128)}', space=vmem, size = 0x8000, scoped, tag = 'scratch operand']
  %s0 = inlined_call_operand.hbm [shape: f32[2,16,128], index: 0, kind: input, shape index: {}]
  %s1 = inlined_call_operand.hbm [shape: bf16[16,64], index: 1, kind: input, shape index: {}]
  %s2 = inlined_call_operand.vmem [shape: f32[1,64], index: 2, kind: input, shape index: {}]
  %s3 = inlined_call_operand.hbm [shape: bf16[64,128], index: 3, kind: input, shape index: {}]
  %s4 = inlined_call_operand.vmem [shape: f32[1,128], index: 4, kind: input, shape index: {}]
  %s5 = inlined_call_operand.hbm [shape: bf16[128,1024], index: 5, kind: input, shape index: {}]
  %s6 = inlined_call_operand.vmem [shape: f32[1,1024], index: 6, kind: input, shape index: {}]
  %s7 = inlined_call_operand.vmem [shape: bf16[2,1,1024], index: 7, kind: output, shape index: {}]
  %s8 = sld [smem:[#allocation0]]
  $region89: #{tpu_custom_call.1} parent=0
    _
  %s10 = ssub.s32 1, %s8
  %s11 = scalar_select 0, %s10, %s8
  $region1: #{tpu_custom_call.1} parent=0
    #allocation3 [shape = 'u8[16384]{0}', space=vmem, size = 0x4000, scoped, tag = 'input window, operand 0']
    #allocation4 [shape = 's32[2]{0}', space=sflag, size = 0x8, scoped, tag = 'scoped memory for tpu_custom_call.1']
    #allocation5 [shape = 'u8[4096]{0}', space=vmem, size = 0x1000, scoped, tag = 'input window, operand 1, single buffered']
    #allocation6 [shape = 's32[1]{0}', space=sflag, size = 0x4, scoped, tag = 'scoped memory for tpu_custom_call.1']
    #allocation7 [shape = 'u8[16384]{0}', space=vmem, size = 0x4000, scoped, tag = 'input window, operand 3, single buffered']
    #allocation8 [shape = 'u8[262144]{0}', space=vmem, size = 0x40000, scoped, tag = 'input window, operand 5, single buffered']
    #allocation9 [shape = 's32[1]{0}', space=sflag, size = 0x4, scoped, tag = 'scoped memory for tpu_custom_call.1']
    %12 = vsyncpa [#allocation4], 0
    %s13 = scalar_lea.sflag [#allocation4], 1
    %14 = vsyncpa %s13, 0
    %15 = vsyncpa [#allocation6], 0
    %16 = vsyncpa [#allocation9], 0
    loop: start=0, step=1, limit=4
    $region2: #{tpu_custom_call.1} parent=1 // loop_pre_header
      _
    $region3: #{tpu_custom_call.1} parent=1 // loop_header
      %s18 = sphi 0, %s22
      %p19 = scmp.ge.s32.totalorder %s18, 4
      %s25 = sphi 0, %s37
      %s26 = sphi 0, %s33
      %s27 = sphi 0, %s25
      %s28 = sphi 0, %s26
      %s29 = sphi 0, %s27
      %s30 = sphi 0, %s28
      %s42 = sphi 0, %s44
      %s45 = sphi 0, %s42
      %s46 = sphi 0, %s45
      %s62 = sphi 0, %s46
      %s66 = sphi 0, %s66
      %s68 = sphi 0, %s66
      %s69 = sphi 0, %s68
      %s83 = sphi 0, %s69
      %s87 = sphi 0, %s87
      %s89 = sphi 0, %s87
      %s90 = sphi 0, %s89
      %s104 = sphi 0, %s90
      %s108 = sphi 0, %s108
      %s110 = sphi 0, %s108
      %s111 = sphi 0, %s110
      %s125 = sphi 0, %s111
      %s129 = sphi 0, %s129
      %s131 = sphi 0, %s129
      %s132 = sphi 0, %s131
      %s146 = sphi 0, %s132
      %s150 = sphi 0, %s150
      %s152 = sphi 0, %s150
      %s153 = sphi 0, %s152
      %s167 = sphi 0, %s153
      %s171 = sphi 0, %s171
      %s173 = sphi 0, %s171
      %s174 = sphi 0, %s173
      %s188 = sphi 0, %s174
      %s194 = sphi 0, %s196
      %s197 = sphi 0, %s194
      %s198 = sphi 0, %s197
      %s214 = sphi 0, %s198
    $region4: #{tpu_custom_call.1} parent=1 // loop_header_branch
      %21 = sbr.rel (%p19) target = $region8
    $region5: #{tpu_custom_call.1} parent=1 // loop_body
      %s23 = ssub.s32 %s18, 1
      %s24 = ssub.s32 %s18, 2
      %s31 = sadd.s32 1, %s26
      %p32 = scmp.ge.s32.totalorder %s31, 1
      %s33 = scalar_select %p32, 0, %s31
      %s34 = sadd.s32 1, %s25
      %s35 = scalar_select %p32, %s34, %s25
      %p36 = scmp.ge.s32.totalorder %s35, 2
      %s37 = scalar_select %p36, 0, %s35
      %s38 = ssub.s32 %s25, %s37
      %s39 = ssub.s32 %s26, %s33
      %s40 = sor.u32 %s38, %s39
      %p41 = scmp.eq.s32.totalorder %s40, 0
      %s43 = sadd.s32 %s42, 1
      %s44 = scalar_select %p41, %s42, %s43
      %p47 = pneg %p41
      %p48 = scmp.eq.s32.totalorder %s18, 1
      %p49 = por %p47, %p48
      %p50 = scmp.ne.s32.totalorder %s42, %s45
      %p51 = scmp.eq.s32.totalorder %s18, 0
      %p52 = por %p50, %p51
      %p53 = scmp.ne.s32.totalorder %s42, %s45
      %p54 = scmp.eq.s32.totalorder %s23, 1
      %p55 = por %p53, %p54
      %p56 = scmp.ne.s32.totalorder %s45, %s46
      %p57 = scmp.eq.s32.totalorder %s23, 0
      %p58 = por %p56, %p57
      %p59 = scmp.ne.s32.totalorder %s45, %s46
      %p60 = scmp.eq.s32.totalorder %s24, 1
      %p61 = por %p59, %p60
      %p63 = scmp.ne.s32.totalorder %s46, %s62
      %p64 = scmp.eq.s32.totalorder %s24, 0
      %p65 = por %p63, %p64
      %s67 = sadd.s32 %s66, 1
      %p70 = scmp.eq.s32.totalorder %s18, 1
      %p71 = scmp.ne.s32.totalorder %s66, %s68
      %p72 = scmp.eq.s32.totalorder %s18, 0
      %p73 = por %p71, %p72
      %p74 = scmp.ne.s32.totalorder %s66, %s68
      %p75 = scmp.eq.s32.totalorder %s23, 1
      %p76 = por %p74, %p75
      %p77 = scmp.ne.s32.totalorder %s68, %s69
      %p78 = scmp.eq.s32.totalorder %s23, 0
      %p79 = por %p77, %p78
      %p80 = scmp.ne.s32.totalorder %s68, %s69
      %p81 = scmp.eq.s32.totalorder %s24, 1
      %p82 = por %p80, %p81
      %p84 = scmp.ne.s32.totalorder %s69, %s83
      %p85 = scmp.eq.s32.totalorder %s24, 0
      %p86 = por %p84, %p85
      %s88 = sadd.s32 %s87, 1
      %p91 = scmp.eq.s32.totalorder %s18, 1
      %p92 = scmp.ne.s32.totalorder %s87, %s89
      %p93 = scmp.eq.s32.totalorder %s18, 0
      %p94 = por %p92, %p93
      %p95 = scmp.ne.s32.totalorder %s87, %s89
      %p96 = scmp.eq.s32.totalorder %s23, 1
      %p97 = por %p95, %p96
      %p98 = scmp.ne.s32.totalorder %s89, %s90
      %p99 = scmp.eq.s32.totalorder %s23, 0
      %p100 = por %p98, %p99
      %p101 = scmp.ne.s32.totalorder %s89, %s90
      %p102 = scmp.eq.s32.totalorder %s24, 1
      %p103 = por %p101, %p102
      %p105 = scmp.ne.s32.totalorder %s90, %s104
      %p106 = scmp.eq.s32.totalorder %s24, 0
      %p107 = por %p105, %p106
      %s109 = sadd.s32 %s108, 1
      %p112 = scmp.eq.s32.totalorder %s18, 1
      %p113 = scmp.ne.s32.totalorder %s108, %s110
      %p114 = scmp.eq.s32.totalorder %s18, 0
      %p115 = por %p113, %p114
      %p116 = scmp.ne.s32.totalorder %s108, %s110
      %p117 = scmp.eq.s32.totalorder %s23, 1
      %p118 = por %p116, %p117
      %p119 = scmp.ne.s32.totalorder %s110, %s111
      %p120 = scmp.eq.s32.totalorder %s23, 0
      %p121 = por %p119, %p120
      %p122 = scmp.ne.s32.totalorder %s110, %s111
      %p123 = scmp.eq.s32.totalorder %s24, 1
      %p124 = por %p122, %p123
      %p126 = scmp.ne.s32.totalorder %s111, %s125
      %p127 = scmp.eq.s32.totalorder %s24, 0
      %p128 = por %p126, %p127
      %s130 = sadd.s32 %s129, 1
      %p133 = scmp.eq.s32.totalorder %s18, 1
      %p134 = scmp.ne.s32.totalorder %s129, %s131
      %p135 = scmp.eq.s32.totalorder %s18, 0
      %p136 = por %p134, %p135
      %p137 = scmp.ne.s32.totalorder %s129, %s131
      %p138 = scmp.eq.s32.totalorder %s23, 1
      %p139 = por %p137, %p138
      %p140 = scmp.ne.s32.totalorder %s131, %s132
      %p141 = scmp.eq.s32.totalorder %s23, 0
      %p142 = por %p140, %p141
      %p143 = scmp.ne.s32.totalorder %s131, %s132
      %p144 = scmp.eq.s32.totalorder %s24, 1
      %p145 = por %p143, %p144
      %p147 = scmp.ne.s32.totalorder %s132, %s146
      %p148 = scmp.eq.s32.totalorder %s24, 0
      %p149 = por %p147, %p148
      %s151 = sadd.s32 %s150, 1
      %p154 = scmp.eq.s32.totalorder %s18, 1
      %p155 = scmp.ne.s32.totalorder %s150, %s152
      %p156 = scmp.eq.s32.totalorder %s18, 0
      %p157 = por %p155, %p156
      %p158 = scmp.ne.s32.totalorder %s150, %s152
      %p159 = scmp.eq.s32.totalorder %s23, 1
      %p160 = por %p158, %p159
      %p161 = scmp.ne.s32.totalorder %s152, %s153
      %p162 = scmp.eq.s32.totalorder %s23, 0
      %p163 = por %p161, %p162
      %p164 = scmp.ne.s32.totalorder %s152, %s153
      %p165 = scmp.eq.s32.totalorder %s24, 1
      %p166 = por %p164, %p165
      %p168 = scmp.ne.s32.totalorder %s153, %s167
      %p169 = scmp.eq.s32.totalorder %s24, 0
      %p170 = por %p168, %p169
      %s172 = sadd.s32 %s171, 1
      %p175 = scmp.eq.s32.totalorder %s18, 1
      %p176 = scmp.ne.s32.totalorder %s171, %s173
      %p177 = scmp.eq.s32.totalorder %s18, 0
      %p178 = por %p176, %p177
      %p179 = scmp.ne.s32.totalorder %s171, %s173
      %p180 = scmp.eq.s32.totalorder %s23, 1
      %p181 = por %p179, %p180
      %p182 = scmp.ne.s32.totalorder %s173, %s174
      %p183 = scmp.eq.s32.totalorder %s23, 0
      %p184 = por %p182, %p183
      %p185 = scmp.ne.s32.totalorder %s173, %s174
      %p186 = scmp.eq.s32.totalorder %s24, 1
      %p187 = por %p185, %p186
      %p189 = scmp.ne.s32.totalorder %s174, %s188
      %p190 = scmp.eq.s32.totalorder %s24, 0
      %p191 = por %p189, %p190
      %s192 = ssub.s32 %s25, %s37
      %p193 = scmp.eq.s32.totalorder %s192, 0
      %s195 = sadd.s32 %s194, 1
      %s196 = scalar_select %p193, %s194, %s195
      %p199 = pneg %p193
      %p200 = scmp.eq.s32.totalorder %s18, 1
      %p201 = por %p199, %p200
      %p202 = scmp.ne.s32.totalorder %s194, %s197
      %p203 = scmp.eq.s32.totalorder %s18, 0
      %p204 = por %p202, %p203
      %p205 = scmp.ne.s32.totalorder %s194, %s197
      %p206 = scmp.eq.s32.totalorder %s23, 1
      %p207 = por %p205, %p206
      %p208 = scmp.ne.s32.totalorder %s197, %s198
      %p209 = scmp.eq.s32.totalorder %s23, 0
      %p210 = por %p208, %p209
      %p211 = scmp.ne.s32.totalorder %s197, %s198
      %p212 = scmp.eq.s32.totalorder %s24, 1
      %p213 = por %p211, %p212
      %p215 = scmp.ne.s32.totalorder %s198, %s214
      %p216 = scmp.eq.s32.totalorder %s24, 0
      %p217 = por %p215, %p216
      %p218 = scmp.le.s32.totalorder 1, %s18
      %p219 = scmp.lt.s32.totalorder %s18, 3
      %p220 = pnand %p218, %p219
      %p221 = pneg %p220
      // Predicated region
      $region9: #{tpu_custom_call.1} parent=5 // pred_check
        _
      $region10: #{tpu_custom_call.1} parent=5 // pred_check_branch
        %223 = sbr.rel (%p220) target = $region12
      $region11: #{tpu_custom_call.1} parent=5 // pred_region
        %s224 = ssub.s32 %s18, 1
        // Predicated region
        $region13: #{tpu_custom_call.1} parent=11 // pred_check
          %p225 = pneg %p79
        $region14: #{tpu_custom_call.1} parent=11 // pred_check_branch
          %227 = sbr.rel (%p225) target = $region16
        $region15: #{tpu_custom_call.1} parent=11 // pred_region
          %s229 = ssub.s32 128, 128
          %230 = vsyncadd [#allocation6], %s229
          %s231 = sshll.u32 [#allocation5], 4
          %s232 = int_to_ptr.vmem [resolvable:$true] %s231
          %237 = dma.hbm_to_vmem [thread:$0]  %s1, 128, %s232, [#allocation6], 64, 64, 4
        $region16: #{tpu_custom_call.1} parent=11 // pred_fallthru
          _
        // Predicated region
        $region17: #{tpu_custom_call.1} parent=11 // pred_check
          %p238 = pneg %p100
        $region18: #{tpu_custom_call.1} parent=11 // pred_check_branch
          %240 = sbr.rel (%p238) target = $region20
        $region19: #{tpu_custom_call.1} parent=11 // pred_region
          _
        $region20: #{tpu_custom_call.1} parent=11 // pred_fallthru
          _
        // Predicated region
        $region21: #{tpu_custom_call.1} parent=11 // pred_check
          %p241 = pneg %p121
        $region22: #{tpu_custom_call.1} parent=11 // pred_check_branch
          %243 = sbr.rel (%p241) target = $region24
        $region23: #{tpu_custom_call.1} parent=11 // pred_region
          %s245 = ssub.s32 512, 512
          %246 = vsyncadd [#allocation6], %s245
          %s247 = sshll.u32 [#allocation7], 4
          %s248 = int_to_ptr.vmem [resolvable:$true] %s247
          %253 = dma.hbm_to_vmem [thread:$0]  %s3, 512, %s248, [#allocation6], 64, 64, 4
        $region24: #{tpu_custom_call.1} parent=11 // pred_fallthru
          _
        // Predicated region
        $region25: #{tpu_custom_call.1} parent=11 // pred_check
          %p254 = pneg %p142
        $region26: #{tpu_custom_call.1} parent=11 // pred_check_branch
          %256 = sbr.rel (%p254) target = $region28
        $region27: #{tpu_custom_call.1} parent=11 // pred_region
          _
        $region28: #{tpu_custom_call.1} parent=11 // pred_fallthru
          _
        // Predicated region
        $region29: #{tpu_custom_call.1} parent=11 // pred_check
          %p257 = pneg %p163
        $region30: #{tpu_custom_call.1} parent=11 // pred_check_branch
          %259 = sbr.rel (%p257) target = $region32
        $region31: #{tpu_custom_call.1} parent=11 // pred_region
          %s261 = ssub.s32 8192, 8192
          %262 = vsyncadd [#allocation9], %s261
          %s263 = sshll.u32 [#allocation8], 4
          %s264 = int_to_ptr.vmem [resolvable:$true] %s263
          %269 = dma.hbm_to_vmem [thread:$0]  %s5, 8192, %s264, [#allocation9], 512, 512, 32
        $region32: #{tpu_custom_call.1} parent=11 // pred_fallthru
          _
        // Predicated region
        $region33: #{tpu_custom_call.1} parent=11 // pred_check
          %p270 = pneg %p184
        $region34: #{tpu_custom_call.1} parent=11 // pred_check_branch
          %272 = sbr.rel (%p270) target = $region36
        $region35: #{tpu_custom_call.1} parent=11 // pred_region
          _
        $region36: #{tpu_custom_call.1} parent=11 // pred_fallthru
          _
      $region12: #{tpu_custom_call.1} parent=5 // pred_fallthru
        _
      %p273 = scmp.lt.s32.totalorder %s18, 2
      // Predicated region
      $region37: #{tpu_custom_call.1} parent=5 // pred_check
        %p274 = pneg %p273
      $region38: #{tpu_custom_call.1} parent=5 // pred_check_branch
        %276 = sbr.rel (%p274) target = $region40
      $region39: #{tpu_custom_call.1} parent=5 // pred_region
        // Predicated region
        $region41: #{tpu_custom_call.1} parent=39 // pred_check
          %p277 = pneg %p52
        $region42: #{tpu_custom_call.1} parent=39 // pred_check_branch
          %279 = sbr.rel (%p277) target = $region44
        $region43: #{tpu_custom_call.1} parent=39 // pred_region
          %s280 = sand.u32 %s42, 1
          %s281 = scalar_lea.sflag [#allocation4], %s280
          %s282 = sand.u32 %s42, 1
          %s283 = smul.addr %s282, 16
          %s284 = scalar_lea.vmem [#allocation3], %s283
          %s286 = ssub.s32 256, 256
          %287 = vsyncadd %s281, %s286
          %s288 = smul.addr %s25, 2
          %s289 = sadd.s32 %s26, %s288
          %s290 = smul.addr %s289, 128
          %s291 = scalar_lea.hbm %s0, %s290
          %s292 = sshll.u32 %s284, 4
          %s293 = int_to_ptr.vmem [resolvable:$true] %s292
          %298 = dma.hbm_to_vmem [thread:$0]  %s291, 256, %s293, %s281, 128, 128, 8
        $region44: #{tpu_custom_call.1} parent=39 // pred_fallthru
          _
      $region40: #{tpu_custom_call.1} parent=5 // pred_fallthru
        _
      %p299 = scmp.le.s32.totalorder 1, %s18
      %p300 = scmp.lt.s32.totalorder %s18, 3
      %p301 = pnand %p299, %p300
      %p302 = pneg %p301
      // Predicated region
      $region45: #{tpu_custom_call.1} parent=5 // pred_check
        _
      $region46: #{tpu_custom_call.1} parent=5 // pred_check_branch
        %304 = sbr.rel (%p301) target = $region48
      $region47: #{tpu_custom_call.1} parent=5 // pred_region
        %s305 = ssub.s32 %s18, 1
        %s306 = sand.u32 %s45, 1
        %s307 = scalar_lea.sflag [#allocation4], %s306
        %s308 = sand.u32 %s45, 1
        %s309 = smul.addr %s308, 16
        %s310 = scalar_lea.vmem [#allocation3], %s309
        // Predicated region
        $region49: #{tpu_custom_call.1} parent=47 // pred_check
          %p311 = pneg %p58
        $region50: #{tpu_custom_call.1} parent=47 // pred_check_branch
          %313 = sbr.rel (%p311) target = $region52
        $region51: #{tpu_custom_call.1} parent=47 // pred_region
          %314 = dma.done %s307, 256
        $region52: #{tpu_custom_call.1} parent=47 // pred_fallthru
          _
        // Predicated region
        $region53: #{tpu_custom_call.1} parent=47 // pred_check
          %p315 = pneg %p79
        $region54: #{tpu_custom_call.1} parent=47 // pred_check_branch
          %317 = sbr.rel (%p315) target = $region56
        $region55: #{tpu_custom_call.1} parent=47 // pred_region
          %318 = dma.done [#allocation6], 128
        $region56: #{tpu_custom_call.1} parent=47 // pred_fallthru
          _
        // Predicated region
        $region57: #{tpu_custom_call.1} parent=47 // pred_check
          %p319 = pneg %p121
        $region58: #{tpu_custom_call.1} parent=47 // pred_check_branch
          %321 = sbr.rel (%p319) target = $region60
        $region59: #{tpu_custom_call.1} parent=47 // pred_region
          %322 = dma.done [#allocation6], 512
        $region60: #{tpu_custom_call.1} parent=47 // pred_fallthru
          _
        // Predicated region
        $region61: #{tpu_custom_call.1} parent=47 // pred_check
          %p323 = pneg %p163
        $region62: #{tpu_custom_call.1} parent=47 // pred_check_branch
          %325 = sbr.rel (%p323) target = $region64
        $region63: #{tpu_custom_call.1} parent=47 // pred_region
          %326 = dma.done [#allocation9], 8192
        $region64: #{tpu_custom_call.1} parent=47 // pred_fallthru
          _
        %s327 = sand.u32 %s45, 1
        %s328 = scalar_lea.sflag [#allocation4], %s327
        %s329 = sand.u32 %s45, 1
        %s330 = smul.addr %s329, 16
        %s331 = scalar_lea.vmem [#allocation3], %s330
        %p332 = pneg %p58
        %p333 = pneg %p55
        %p334 = pneg %p79
        %p335 = pneg %p76
        %p336 = pneg %p100
        %p337 = pneg %p97
        %p338 = pneg %p121
        %p339 = pneg %p118
        %p340 = pneg %p142
        %p341 = pneg %p139
        %p342 = pneg %p163
        %p343 = pneg %p160
        %p344 = pneg %p184
        %p345 = pneg %p181
        %p346 = pneg %p210
        %p347 = pneg %p207
        %p348 = scmp.lt.s32.totalorder %s27, 1
        %s349 = scalar_select %p348, %s27, 1
        %s350 = smul.addr %s349, 8
        %s351 = scalar_lea.vmem %s7, %s350
        %p352 = scmp.lt.s32.totalorder %s27, 1
        %s353 = scalar_select %p352, %s27, 1
        %s354 = smul.addr %s353, 8
        %s355 = scalar_lea.vmem %s7, %s354
        %v357 = vld [vmem:[%s310] sm:$0xff]
        %v358 = vld [vmem:[%s310 + $0x8] sm:$0xff]
        %359 = vxpose.xlu0.b32.start [1/16] %v357, 128
        %360 = vxpose.xlu0.b32.cont [2/16] %v358, 128
        %361 = vxpose.xlu0.b32.cont [3/16] 0.0, 128
        %362 = vxpose.xlu0.b32.cont [4/16] 0.0, 128
        %363 = vxpose.xlu0.b32.cont [5/16] 0.0, 128
        %364 = vxpose.xlu0.b32.cont [6/16] 0.0, 128
        %365 = vxpose.xlu0.b32.cont [7/16] 0.0, 128
        %366 = vxpose.xlu0.b32.cont [8/16] 0.0, 128
        %367 = vxpose.xlu0.b32.cont [9/16] 0.0, 128
        %368 = vxpose.xlu0.b32.cont [10/16] 0.0, 128
        %369 = vxpose.xlu0.b32.cont [11/16] 0.0, 128
        %370 = vxpose.xlu0.b32.cont [12/16] 0.0, 128
        %371 = vxpose.xlu0.b32.cont [13/16] 0.0, 128
        %372 = vxpose.xlu0.b32.cont [14/16] 0.0, 128
        %373 = vxpose.xlu0.b32.cont [15/16] 0.0, 128
        %374 = vxpose.xlu0.b32.end [16/16] 0.0, 128
        %v375 = vpop.trf.xlu0
        %v376 = vpop.trf.xlu0
        %v377 = vpop.trf.xlu0
        %v378 = vpop.trf.xlu0
        %v379 = vpop.trf.xlu0
        %v380 = vpop.trf.xlu0
        %v381 = vpop.trf.xlu0
        %v382 = vpop.trf.xlu0
        %v383 = vpop.trf.xlu0
        %v384 = vpop.trf.xlu0
        %v385 = vpop.trf.xlu0
        %v386 = vpop.trf.xlu0
        %v387 = vpop.trf.xlu0
        %v388 = vpop.trf.xlu0
        %v389 = vpop.trf.xlu0
        %v390 = vpop.trf.xlu0
        %v391 = vpack.c.bf16 %v376, %v375
        %v392 = vpack.c.bf16 %v378, %v377
        %v393 = vpack.c.bf16 %v380, %v379
        %v394 = vpack.c.bf16 %v382, %v381
        %v395 = vpack.c.bf16 %v384, %v383
        %v396 = vpack.c.bf16 %v386, %v385
        %v397 = vpack.c.bf16 %v388, %v387
        %v398 = vpack.c.bf16 %v390, %v389
        %v399 = vld [vmem:[#allocation5] sm:$0xf]
        %v400 = vld [vmem:[#allocation5 + $0x4] sm:$0xf]
        %v401 = vld [vmem:[%s2] sm:$0x1]
        %v403 = vlaneseq
        %v404 = vshrl.u32 %v403, 7
        %v405 = vsub.s32 0, %v404
        %v406 = vrot.slane %v401, %v405
        %v410 = vunpack.c.l.b16 %v399
        %v411 = vunpack.c.l.b16 %v400
        %v412 = vpack.c.b16 %v411, %v410
        %vm414 = vcmask 130048
        %v416 = vsel %vm414, %v391, 0
        %v419 = vsel %vm414, %v392, 0
        %v422 = vsel %vm414, %v393, 0
        %v425 = vsel %vm414, %v394, 0
        %v428 = vsel %vm414, %v395, 0
        %v431 = vsel %vm414, %v396, 0
        %v434 = vsel %vm414, %v397, 0
        %v437 = vsel %vm414, %v398, 0
        %439 = vmatprep.subr.bf16.mxu0 0
        %440 = vmatpush1.bf16.msra.mxu0 %v412
        %441 = vmatprep.subr.bf16.mxu0 0
        %442 = vmatpush1.bf16.msra.mxu0 0
        %443 = vmatprep.subr.bf16.mxu0 0
        %444 = vmatpush1.bf16.msra.mxu0 0
        %445 = vmatprep.subr.bf16.mxu0 0
        %446 = vmatpush1.bf16.msra.mxu0 0
        %447 = vmatprep.subr.bf16.mxu0 0
        %448 = vmatpush1.bf16.msra.mxu0 0
        %449 = vmatprep.subr.bf16.mxu0 0
        %450 = vmatpush1.bf16.msra.mxu0 0
        %451 = vmatprep.subr.bf16.mxu0 0
        %452 = vmatpush1.bf16.msra.mxu0 0
        %453 = vmatprep.subr.bf16.mxu0 0
        %454 = vmatpush1.bf16.msra.mxu0 0
        %455 = vmatprep.subr.bf16.mxu0 0
        %456 = vmatpush1.bf16.msra.mxu0 0
        %457 = vmatprep.subr.bf16.mxu0 0
        %458 = vmatpush1.bf16.msra.mxu0 0
        %459 = vmatprep.subr.bf16.mxu0 0
        %460 = vmatpush1.bf16.msra.mxu0 0
        %461 = vmatprep.subr.bf16.mxu0 0
        %462 = vmatpush1.bf16.msra.mxu0 0
        %463 = vmatprep.subr.bf16.mxu0 0
        %464 = vmatpush1.bf16.msra.mxu0 0
        %465 = vmatprep.subr.bf16.mxu0 0
        %466 = vmatpush1.bf16.msra.mxu0 0
        %467 = vmatprep.subr.bf16.mxu0 0
        %468 = vmatpush1.bf16.msra.mxu0 0
        %469 = vmatprep.subr.bf16.mxu0 0
        %470 = vmatpush1.bf16.msra.mxu0 0
        %471 = vmatprep.mubr.bf16.mxu0 0
        %472 = vmatmul.mubr.bf16.gmra.mrb[0].mxu0 %v416
        %v473 = vpop.f32.mrb[0].mxu0
        %v474 = vadd.f32 %v406, %v473
        %v475 = vpop.f32.mrb[0].mxu0
        %v476 = vpop.f32.mrb[0].mxu0
        %v477 = vadd.f32 %v406, %v476
        %v478 = vpop.f32.mrb[0].mxu0
        %479 = vmatprep.mubr.bf16.mxu0 0
        %480 = vmatmul.mubr.bf16.gmra.mrb[0].mxu0 %v419
        %v481 = vpop.f32.mrb[0].mxu0
        %v482 = vadd.f32 %v406, %v481
        %v483 = vpop.f32.mrb[0].mxu0
        %v484 = vpop.f32.mrb[0].mxu0
        %v485 = vadd.f32 %v406, %v484
        %v486 = vpop.f32.mrb[0].mxu0
        %487 = vmatprep.mubr.bf16.mxu0 0
        %488 = vmatmul.mubr.bf16.gmra.mrb[0].mxu0 %v422
        %v489 = vpop.f32.mrb[0].mxu0
        %v490 = vadd.f32 %v406, %v489
        %v491 = vpop.f32.mrb[0].mxu0
        %v492 = vpop.f32.mrb[0].mxu0
        %v493 = vadd.f32 %v406, %v492
        %v494 = vpop.f32.mrb[0].mxu0
        %495 = vmatprep.mubr.bf16.mxu0 0
        %496 = vmatmul.mubr.bf16.gmra.mrb[0].mxu0 %v425
        %v497 = vpop.f32.mrb[0].mxu0
        %v498 = vadd.f32 %v406, %v497
        %v499 = vpop.f32.mrb[0].mxu0
        %v500 = vpop.f32.mrb[0].mxu0
        %v501 = vadd.f32 %v406, %v500
        %v502 = vpop.f32.mrb[0].mxu0
        %503 = vmatprep.mubr.bf16.mxu0 0
        %504 = vmatmul.mubr.bf16.gmra.mrb[0].mxu0 %v428
        %v505 = vpop.f32.mrb[0].mxu0
        %v506 = vadd.f32 %v406, %v505
        %v507 = vpop.f32.mrb[0].mxu0
        %v508 = vpop.f32.mrb[0].mxu0
        %v509 = vadd.f32 %v406, %v508
        %v510 = vpop.f32.mrb[0].mxu0
        %511 = vmatprep.mubr.bf16.mxu0 0
        %512 = vmatmul.mubr.bf16.gmra.mrb[0].mxu0 %v431
        %v513 = vpop.f32.mrb[0].mxu0
        %v514 = vadd.f32 %v406, %v513
        %v515 = vpop.f32.mrb[0].mxu0
        %v516 = vpop.f32.mrb[0].mxu0
        %v517 = vadd.f32 %v406, %v516
        %v518 = vpop.f32.mrb[0].mxu0
        %519 = vmatprep.mubr.bf16.mxu0 0
        %520 = vmatmul.mubr.bf16.gmra.mrb[0].mxu0 %v434
        %v521 = vpop.f32.mrb[0].mxu0
        %v522 = vadd.f32 %v406, %v521
        %v523 = vpop.f32.mrb[0].mxu0
        %v524 = vpop.f32.mrb[0].mxu0
        %v525 = vadd.f32 %v406, %v524
        %v526 = vpop.f32.mrb[0].mxu0
        %527 = vmatprep.mubr.bf16.mxu0 0
        %528 = vmatmul.mubr.bf16.gmra.mrb[0].mxu0 %v437
        %v529 = vpop.f32.mrb[0].mxu0
        %v530 = vadd.f32 %v406, %v529
        %v531 = vpop.f32.mrb[0].mxu0
        %v532 = vpop.f32.mrb[0].mxu0
        %v533 = vadd.f32 %v406, %v532
        %v534 = vpop.f32.mrb[0].mxu0
        %535 = vdwg.mxu0
        %v536 = vmax.f32 %v474, 0.0
        %v537 = vmax.f32 %v477, 0.0
        %v538 = vmax.f32 %v482, 0.0
        %v539 = vmax.f32 %v485, 0.0
        %v540 = vmax.f32 %v490, 0.0
        %v541 = vmax.f32 %v493, 0.0
        %v542 = vmax.f32 %v498, 0.0
        %v543 = vmax.f32 %v501, 0.0
        %v544 = vmax.f32 %v506, 0.0
        %v545 = vmax.f32 %v509, 0.0
        %v546 = vmax.f32 %v514, 0.0
        %v547 = vmax.f32 %v517, 0.0
        %v548 = vmax.f32 %v522, 0.0
        %v549 = vmax.f32 %v525, 0.0
        %v550 = vmax.f32 %v530, 0.0
        %v551 = vmax.f32 %v533, 0.0
        %v552 = vpack.c.bf16 %v537, %v536
        %v553 = vpack.c.bf16 %v539, %v538
        %v554 = vpack.c.bf16 %v541, %v540
        %v555 = vpack.c.bf16 %v543, %v542
        %v556 = vpack.c.bf16 %v545, %v544
        %v557 = vpack.c.bf16 %v547, %v546
        %v558 = vpack.c.bf16 %v549, %v548
        %v559 = vpack.c.bf16 %v551, %v550
        %v560 = vld [vmem:[#allocation7] sm:$0xf]
        %v561 = vld [vmem:[#allocation7 + $0x4] sm:$0xf]
        %v562 = vld [vmem:[#allocation7 + $0x8] sm:$0xf]
        %v563 = vld [vmem:[#allocation7 + $0xc] sm:$0xf]
        %v564 = vld [vmem:[#allocation7 + $0x10] sm:$0xf]
        %v565 = vld [vmem:[#allocation7 + $0x14] sm:$0xf]
        %v566 = vld [vmem:[#allocation7 + $0x18] sm:$0xf]
        %v567 = vld [vmem:[#allocation7 + $0x1c] sm:$0xf]
        %v568 = vld [vmem:[%s4] sm:$0x1]
        %v570 = vlaneseq
        %v571 = vshrl.u32 %v570, 7
        %v572 = vsub.s32 0, %v571
        %v573 = vrot.slane %v568, %v572
        %v583 = vunpack.c.l.b16 %v560
        %v584 = vunpack.c.l.b16 %v561
        %v585 = vunpack.c.l.b16 %v562
        %v586 = vunpack.c.l.b16 %v563
        %v587 = vunpack.c.l.b16 %v564
        %v588 = vunpack.c.l.b16 %v565
        %v589 = vunpack.c.l.b16 %v566
        %v590 = vunpack.c.l.b16 %v567
        %v591 = vpack.c.b16 %v584, %v583
        %v592 = vpack.c.b16 %v586, %v585
        %v593 = vpack.c.b16 %v588, %v587
        %v594 = vpack.c.b16 %v590, %v589
        %vm599 = vcmask 523264
        %v601 = vsel %vm599, %v552, 0
        %v604 = vsel %vm599, %v553, 0
        %v607 = vsel %vm599, %v554, 0
        %v610 = vsel %vm599, %v555, 0
        %v613 = vsel %vm599, %v556, 0
        %v616 = vsel %vm599, %v557, 0
        %v619 = vsel %vm599, %v558, 0
        %v622 = vsel %vm599, %v559, 0
        %624 = vmatprep.subr.bf16.mxu0 0
        %625 = vmatpush1.bf16.msra.mxu0 %v591
        %626 = vmatprep.subr.bf16.mxu0 0
        %627 = vmatpush1.bf16.msra.mxu0 %v592
        %628 = vmatprep.subr.bf16.mxu0 0
        %629 = vmatpush1.bf16.msra.mxu0 %v593
        %630 = vmatprep.subr.bf16.mxu0 0
        %631 = vmatpush1.bf16.msra.mxu0 %v594
        %632 = vmatprep.subr.bf16.mxu0 0
        %633 = vmatpush1.bf16.msra.mxu0 0
        %634 = vmatprep.subr.bf16.mxu0 0
        %635 = vmatpush1.bf16.msra.mxu0 0
        %636 = vmatprep.subr.bf16.mxu0 0
        %637 = vmatpush1.bf16.msra.mxu0 0
        %638 = vmatprep.subr.bf16.mxu0 0
        %639 = vmatpush1.bf16.msra.mxu0 0
        %640 = vmatprep.subr.bf16.mxu0 0
        %641 = vmatpush1.bf16.msra.mxu0 0
        %642 = vmatprep.subr.bf16.mxu0 0
        %643 = vmatpush1.bf16.msra.mxu0 0
        %644 = vmatprep.subr.bf16.mxu0 0
        %645 = vmatpush1.bf16.msra.mxu0 0
        %646 = vmatprep.subr.bf16.mxu0 0
        %647 = vmatpush1.bf16.msra.mxu0 0
        %648 = vmatprep.subr.bf16.mxu0 0
        %649 = vmatpush1.bf16.msra.mxu0 0
        %650 = vmatprep.subr.bf16.mxu0 0
        %651 = vmatpush1.bf16.msra.mxu0 0
        %652 = vmatprep.subr.bf16.mxu0 0
        %653 = vmatpush1.bf16.msra.mxu0 0
        %654 = vmatprep.subr.bf16.mxu0 0
        %655 = vmatpush1.bf16.msra.mxu0 0
        %656 = vmatprep.mubr.bf16.mxu0 0
        %657 = vmatmul.mubr.bf16.gmra.mrb[0].mxu0 %v601
        %v658 = vpop.f32.mrb[0].mxu0
        %v659 = vadd.f32 %v573, %v658
        %v660 = vpop.f32.mrb[0].mxu0
        %v661 = vpop.f32.mrb[0].mxu0
        %v662 = vadd.f32 %v573, %v661
        %v663 = vpop.f32.mrb[0].mxu0
        %664 = vmatprep.mubr.bf16.mxu0 0
        %665 = vmatmul.mubr.bf16.gmra.mrb[0].mxu0 %v604
        %v666 = vpop.f32.mrb[0].mxu0
        %v667 = vadd.f32 %v573, %v666
        %v668 = vpop.f32.mrb[0].mxu0
        %v669 = vpop.f32.mrb[0].mxu0
        %v670 = vadd.f32 %v573, %v669
        %v671 = vpop.f32.mrb[0].mxu0
        %672 = vmatprep.mubr.bf16.mxu0 0
        %673 = vmatmul.mubr.bf16.gmra.mrb[0].mxu0 %v607
        %v674 = vpop.f32.mrb[0].mxu0
        %v675 = vadd.f32 %v573, %v674
        %v676 = vpop.f32.mrb[0].mxu0
        %v677 = vpop.f32.mrb[0].mxu0
        %v678 = vadd.f32 %v573, %v677
        %v679 = vpop.f32.mrb[0].mxu0
        %680 = vmatprep.mubr.bf16.mxu0 0
        %681 = vmatmul.mubr.bf16.gmra.mrb[0].mxu0 %v610
        %v682 = vpop.f32.mrb[0].mxu0
        %v683 = vadd.f32 %v573, %v682
        %v684 = vpop.f32.mrb[0].mxu0
        %v685 = vpop.f32.mrb[0].mxu0
        %v686 = vadd.f32 %v573, %v685
        %v687 = vpop.f32.mrb[0].mxu0
        %688 = vmatprep.mubr.bf16.mxu0 0
        %689 = vmatmul.mubr.bf16.gmra.mrb[0].mxu0 %v613
        %v690 = vpop.f32.mrb[0].mxu0
        %v691 = vadd.f32 %v573, %v690
        %v692 = vpop.f32.mrb[0].mxu0
        %v693 = vpop.f32.mrb[0].mxu0
        %v694 = vadd.f32 %v573, %v693
        %v695 = vpop.f32.mrb[0].mxu0
        %696 = vmatprep.mubr.bf16.mxu0 0
        %697 = vmatmul.mubr.bf16.gmra.mrb[0].mxu0 %v616
        %v698 = vpop.f32.mrb[0].mxu0
        %v699 = vadd.f32 %v573, %v698
        %v700 = vpop.f32.mrb[0].mxu0
        %v701 = vpop.f32.mrb[0].mxu0
        %v702 = vadd.f32 %v573, %v701
        %v703 = vpop.f32.mrb[0].mxu0
        %704 = vmatprep.mubr.bf16.mxu0 0
        %705 = vmatmul.mubr.bf16.gmra.mrb[0].mxu0 %v619
        %v706 = vpop.f32.mrb[0].mxu0
        %v707 = vadd.f32 %v573, %v706
        %v708 = vpop.f32.mrb[0].mxu0
        %v709 = vpop.f32.mrb[0].mxu0
        %v710 = vadd.f32 %v573, %v709
        %v711 = vpop.f32.mrb[0].mxu0
        %712 = vmatprep.mubr.bf16.mxu0 0
        %713 = vmatmul.mubr.bf16.gmra.mrb[0].mxu0 %v622
        %v714 = vpop.f32.mrb[0].mxu0
        %v715 = vadd.f32 %v573, %v714
        %v716 = vpop.f32.mrb[0].mxu0
        %v717 = vpop.f32.mrb[0].mxu0
        %v718 = vadd.f32 %v573, %v717
        %v719 = vpop.f32.mrb[0].mxu0
        %720 = vdwg.mxu0
        %v721 = vmax.f32 %v659, 0.0
        %v722 = vmax.f32 %v662, 0.0
        %v723 = vmax.f32 %v667, 0.0
        %v724 = vmax.f32 %v670, 0.0
        %v725 = vmax.f32 %v675, 0.0
        %v726 = vmax.f32 %v678, 0.0
        %v727 = vmax.f32 %v683, 0.0
        %v728 = vmax.f32 %v686, 0.0
        %v729 = vmax.f32 %v691, 0.0
        %v730 = vmax.f32 %v694, 0.0
        %v731 = vmax.f32 %v699, 0.0
        %v732 = vmax.f32 %v702, 0.0
        %v733 = vmax.f32 %v707, 0.0
        %v734 = vmax.f32 %v710, 0.0
        %v735 = vmax.f32 %v715, 0.0
        %v736 = vmax.f32 %v718, 0.0
        %v737 = vpack.c.bf16 %v722, %v721
        %v738 = vpack.c.bf16 %v724, %v723
        %v739 = vpack.c.bf16 %v726, %v725
        %v740 = vpack.c.bf16 %v728, %v727
        %v741 = vpack.c.bf16 %v730, %v729
        %v742 = vpack.c.bf16 %v732, %v731
        %v743 = vpack.c.bf16 %v734, %v733
        %v744 = vpack.c.bf16 %v736, %v735
        %v745 = vld [vmem:[#allocation8] sm:$0xff]
        %v746 = vld [vmem:[#allocation8 + $0x8] sm:$0xff]
        %v747 = vld [vmem:[#allocation8 + $0x10] sm:$0xff]
        %v748 = vld [vmem:[#allocation8 + $0x18] sm:$0xff]
        %v749 = vld [vmem:[#allocation8 + $0x20] sm:$0xff]
        %v750 = vld [vmem:[#allocation8 + $0x28] sm:$0xff]
        %v751 = vld [vmem:[#allocation8 + $0x30] sm:$0xff]
        %v752 = vld [vmem:[#allocation8 + $0x38] sm:$0xff]
        %v753 = vld [vmem:[#allocation8 + $0x40] sm:$0xff]
        %v754 = vld [vmem:[#allocation8 + $0x48] sm:$0xff]
        %v755 = vld [vmem:[#allocation8 + $0x50] sm:$0xff]
        %v756 = vld [vmem:[#allocation8 + $0x58] sm:$0xff]
        %v757 = vld [vmem:[#allocation8 + $0x60] sm:$0xff]
        %v758 = vld [vmem:[#allocation8 + $0x68] sm:$0xff]
        %v759 = vld [vmem:[#allocation8 + $0x70] sm:$0xff]
        %v760 = vld [vmem:[#allocation8 + $0x78] sm:$0xff]
        %v761 = vld [vmem:[#allocation8 + $0x80] sm:$0xff]
        %v762 = vld [vmem:[#allocation8 + $0x88] sm:$0xff]
        %v763 = vld [vmem:[#allocation8 + $0x90] sm:$0xff]
        %v764 = vld [vmem:[#allocation8 + $0x98] sm:$0xff]
        %v765 = vld [vmem:[#allocation8 + $0xa0] sm:$0xff]
        %v766 = vld [vmem:[#allocation8 + $0xa8] sm:$0xff]
        %v767 = vld [vmem:[#allocation8 + $0xb0] sm:$0xff]
        %v768 = vld [vmem:[#allocation8 + $0xb8] sm:$0xff]
        %v769 = vld [vmem:[#allocation8 + $0xc0] sm:$0xff]
        %v770 = vld [vmem:[#allocation8 + $0xc8] sm:$0xff]
        %v771 = vld [vmem:[#allocation8 + $0xd0] sm:$0xff]
        %v772 = vld [vmem:[#allocation8 + $0xd8] sm:$0xff]
        %v773 = vld [vmem:[#allocation8 + $0xe0] sm:$0xff]
        %v774 = vld [vmem:[#allocation8 + $0xe8] sm:$0xff]
        %v775 = vld [vmem:[#allocation8 + $0xf0] sm:$0xff]
        %v776 = vld [vmem:[#allocation8 + $0xf8] sm:$0xff]
        %v777 = vld [vmem:[#allocation8 + $0x100] sm:$0xff]
        %v778 = vld [vmem:[#allocation8 + $0x108] sm:$0xff]
        %v779 = vld [vmem:[#allocation8 + $0x110] sm:$0xff]
        %v780 = vld [vmem:[#allocation8 + $0x118] sm:$0xff]
        %v781 = vld [vmem:[#allocation8 + $0x120] sm:$0xff]
        %v782 = vld [vmem:[#allocation8 + $0x128] sm:$0xff]
        %v783 = vld [vmem:[#allocation8 + $0x130] sm:$0xff]
        %v784 = vld [vmem:[#allocation8 + $0x138] sm:$0xff]
        %v785 = vld [vmem:[#allocation8 + $0x140] sm:$0xff]
        %v786 = vld [vmem:[#allocation8 + $0x148] sm:$0xff]
        %v787 = vld [vmem:[#allocation8 + $0x150] sm:$0xff]
        %v788 = vld [vmem:[#allocation8 + $0x158] sm:$0xff]
        %v789 = vld [vmem:[#allocation8 + $0x160] sm:$0xff]
        %v790 = vld [vmem:[#allocation8 + $0x168] sm:$0xff]
        %v791 = vld [vmem:[#allocation8 + $0x170] sm:$0xff]
        %v792 = vld [vmem:[#allocation8 + $0x178] sm:$0xff]
        %v793 = vld [vmem:[#allocation8 + $0x180] sm:$0xff]
        %v794 = vld [vmem:[#allocation8 + $0x188] sm:$0xff]
        %v795 = vld [vmem:[#allocation8 + $0x190] sm:$0xff]
        %v796 = vld [vmem:[#allocation8 + $0x198] sm:$0xff]
        %v797 = vld [vmem:[#allocation8 + $0x1a0] sm:$0xff]
        %v798 = vld [vmem:[#allocation8 + $0x1a8] sm:$0xff]
        %v799 = vld [vmem:[#allocation8 + $0x1b0] sm:$0xff]
        %v800 = vld [vmem:[#allocation8 + $0x1b8] sm:$0xff]
        %v801 = vld [vmem:[#allocation8 + $0x1c0] sm:$0xff]
        %v802 = vld [vmem:[#allocation8 + $0x1c8] sm:$0xff]
        %v803 = vld [vmem:[#allocation8 + $0x1d0] sm:$0xff]
        %v804 = vld [vmem:[#allocation8 + $0x1d8] sm:$0xff]
        %v805 = vld [vmem:[#allocation8 + $0x1e0] sm:$0xff]
        %v806 = vld [vmem:[#allocation8 + $0x1e8] sm:$0xff]
        %v807 = vld [vmem:[#allocation8 + $0x1f0] sm:$0xff]
        %v808 = vld [vmem:[#allocation8 + $0x1f8] sm:$0xff]
        %v873 = vunpack.c.l.b16 %v745
        %v874 = vunpack.c.h.b16 %v745
        %v875 = vunpack.c.l.b16 %v746
        %v876 = vunpack.c.h.b16 %v746
        %v877 = vunpack.c.l.b16 %v747
        %v878 = vunpack.c.h.b16 %v747
        %v879 = vunpack.c.l.b16 %v748
        %v880 = vunpack.c.h.b16 %v748
        %v881 = vunpack.c.l.b16 %v749
        %v882 = vunpack.c.h.b16 %v749
        %v883 = vunpack.c.l.b16 %v750
        %v884 = vunpack.c.h.b16 %v750
        %v885 = vunpack.c.l.b16 %v751
        %v886 = vunpack.c.h.b16 %v751
        %v887 = vunpack.c.l.b16 %v752
        %v888 = vunpack.c.h.b16 %v752
        %v889 = vunpack.c.l.b16 %v753
        %v890 = vunpack.c.h.b16 %v753
        %v891 = vunpack.c.l.b16 %v754
        %v892 = vunpack.c.h.b16 %v754
        %v893 = vunpack.c.l.b16 %v755
        %v894 = vunpack.c.h.b16 %v755
        %v895 = vunpack.c.l.b16 %v756
        %v896 = vunpack.c.h.b16 %v756
        %v897 = vunpack.c.l.b16 %v757
        %v898 = vunpack.c.h.b16 %v757
        %v899 = vunpack.c.l.b16 %v758
        %v900 = vunpack.c.h.b16 %v758
        %v901 = vunpack.c.l.b16 %v759
        %v902 = vunpack.c.h.b16 %v759
        %v903 = vunpack.c.l.b16 %v760
        %v904 = vunpack.c.h.b16 %v760
        %v905 = vunpack.c.l.b16 %v761
        %v906 = vunpack.c.h.b16 %v761
        %v907 = vunpack.c.l.b16 %v762
        %v908 = vunpack.c.h.b16 %v762
        %v909 = vunpack.c.l.b16 %v763
        %v910 = vunpack.c.h.b16 %v763
        %v911 = vunpack.c.l.b16 %v764
        %v912 = vunpack.c.h.b16 %v764
        %v913 = vunpack.c.l.b16 %v765
        %v914 = vunpack.c.h.b16 %v765
        %v915 = vunpack.c.l.b16 %v766
        %v916 = vunpack.c.h.b16 %v766
        %v917 = vunpack.c.l.b16 %v767
        %v918 = vunpack.c.h.b16 %v767
        %v919 = vunpack.c.l.b16 %v768
        %v920 = vunpack.c.h.b16 %v768
        %v921 = vunpack.c.l.b16 %v769
        %v922 = vunpack.c.h.b16 %v769
        %v923 = vunpack.c.l.b16 %v770
        %v924 = vunpack.c.h.b16 %v770
        %v925 = vunpack.c.l.b16 %v771
        %v926 = vunpack.c.h.b16 %v771
        %v927 = vunpack.c.l.b16 %v772
        %v928 = vunpack.c.h.b16 %v772
        %v929 = vunpack.c.l.b16 %v773
        %v930 = vunpack.c.h.b16 %v773
        %v931 = vunpack.c.l.b16 %v774
        %v932 = vunpack.c.h.b16 %v774
        %v933 = vunpack.c.l.b16 %v775
        %v934 = vunpack.c.h.b16 %v775
        %v935 = vunpack.c.l.b16 %v776
        %v936 = vunpack.c.h.b16 %v776
        %v937 = vunpack.c.l.b16 %v777
        %v938 = vunpack.c.h.b16 %v777
        %v939 = vunpack.c.l.b16 %v778
        %v940 = vunpack.c.h.b16 %v778
        %v941 = vunpack.c.l.b16 %v779
        %v942 = vunpack.c.h.b16 %v779
        %v943 = vunpack.c.l.b16 %v780
        %v944 = vunpack.c.h.b16 %v780
        %v945 = vunpack.c.l.b16 %v781
        %v946 = vunpack.c.h.b16 %v781
        %v947 = vunpack.c.l.b16 %v782
        %v948 = vunpack.c.h.b16 %v782
        %v949 = vunpack.c.l.b16 %v783
        %v950 = vunpack.c.h.b16 %v783
        %v951 = vunpack.c.l.b16 %v784
        %v952 = vunpack.c.h.b16 %v784
        %v953 = vunpack.c.l.b16 %v785
        %v954 = vunpack.c.h.b16 %v785
        %v955 = vunpack.c.l.b16 %v786
        %v956 = vunpack.c.h.b16 %v786
        %v957 = vunpack.c.l.b16 %v787
        %v958 = vunpack.c.h.b16 %v787
        %v959 = vunpack.c.l.b16 %v788
        %v960 = vunpack.c.h.b16 %v788
        %v961 = vunpack.c.l.b16 %v789
        %v962 = vunpack.c.h.b16 %v789
        %v963 = vunpack.c.l.b16 %v790
        %v964 = vunpack.c.h.b16 %v790
        %v965 = vunpack.c.l.b16 %v791
        %v966 = vunpack.c.h.b16 %v791
        %v967 = vunpack.c.l.b16 %v792
        %v968 = vunpack.c.h.b16 %v792
        %v969 = vunpack.c.l.b16 %v793
        %v970 = vunpack.c.h.b16 %v793
        %v971 = vunpack.c.l.b16 %v794
        %v972 = vunpack.c.h.b16 %v794
        %v973 = vunpack.c.l.b16 %v795
        %v974 = vunpack.c.h.b16 %v795
        %v975 = vunpack.c.l.b16 %v796
        %v976 = vunpack.c.h.b16 %v796
        %v977 = vunpack.c.l.b16 %v797
        %v978 = vunpack.c.h.b16 %v797
        %v979 = vunpack.c.l.b16 %v798
        %v980 = vunpack.c.h.b16 %v798
        %v981 = vunpack.c.l.b16 %v799
        %v982 = vunpack.c.h.b16 %v799
        %v983 = vunpack.c.l.b16 %v800
        %v984 = vunpack.c.h.b16 %v800
        %v985 = vunpack.c.l.b16 %v801
        %v986 = vunpack.c.h.b16 %v801
        %v987 = vunpack.c.l.b16 %v802
        %v988 = vunpack.c.h.b16 %v802
        %v989 = vunpack.c.l.b16 %v803
        %v990 = vunpack.c.h.b16 %v803
        %v991 = vunpack.c.l.b16 %v804
        %v992 = vunpack.c.h.b16 %v804
        %v993 = vunpack.c.l.b16 %v805
        %v994 = vunpack.c.h.b16 %v805
        %v995 = vunpack.c.l.b16 %v806
        %v996 = vunpack.c.h.b16 %v806
        %v997 = vunpack.c.l.b16 %v807
        %v998 = vunpack.c.h.b16 %v807
        %v999 = vunpack.c.l.b16 %v808
        %v1000 = vunpack.c.h.b16 %v808
        %v1001 = vpack.c.b16 %v881, %v873
        %v1002 = vpack.c.b16 %v882, %v874
        %v1003 = vpack.c.b16 %v883, %v875
        %v1004 = vpack.c.b16 %v884, %v876
        %v1005 = vpack.c.b16 %v885, %v877
        %v1006 = vpack.c.b16 %v886, %v878
        %v1007 = vpack.c.b16 %v887, %v879
        %v1008 = vpack.c.b16 %v888, %v880
        %v1009 = vpack.c.b16 %v897, %v889
        %v1010 = vpack.c.b16 %v898, %v890
        %v1011 = vpack.c.b16 %v899, %v891
        %v1012 = vpack.c.b16 %v900, %v892
        %v1013 = vpack.c.b16 %v901, %v893
        %v1014 = vpack.c.b16 %v902, %v894
        %v1015 = vpack.c.b16 %v903, %v895
        %v1016 = vpack.c.b16 %v904, %v896
        %v1017 = vpack.c.b16 %v913, %v905
        %v1018 = vpack.c.b16 %v914, %v906
        %v1019 = vpack.c.b16 %v915, %v907
        %v1020 = vpack.c.b16 %v916, %v908
        %v1021 = vpack.c.b16 %v917, %v909
        %v1022 = vpack.c.b16 %v918, %v910
        %v1023 = vpack.c.b16 %v919, %v911
        %v1024 = vpack.c.b16 %v920, %v912
        %v1025 = vpack.c.b16 %v929, %v921
        %v1026 = vpack.c.b16 %v930, %v922
        %v1027 = vpack.c.b16 %v931, %v923
        %v1028 = vpack.c.b16 %v932, %v924
        %v1029 = vpack.c.b16 %v933, %v925
        %v1030 = vpack.c.b16 %v934, %v926
        %v1031 = vpack.c.b16 %v935, %v927
        %v1032 = vpack.c.b16 %v936, %v928
        %v1033 = vpack.c.b16 %v945, %v937
        %v1034 = vpack.c.b16 %v946, %v938
        %v1035 = vpack.c.b16 %v947, %v939
        %v1036 = vpack.c.b16 %v948, %v940
        %v1037 = vpack.c.b16 %v949, %v941
        %v1038 = vpack.c.b16 %v950, %v942
        %v1039 = vpack.c.b16 %v951, %v943
        %v1040 = vpack.c.b16 %v952, %v944
        %v1041 = vpack.c.b16 %v961, %v953
        %v1042 = vpack.c.b16 %v962, %v954
        %v1043 = vpack.c.b16 %v963, %v955
        %v1044 = vpack.c.b16 %v964, %v956
        %v1045 = vpack.c.b16 %v965, %v957
        %v1046 = vpack.c.b16 %v966, %v958
        %v1047 = vpack.c.b16 %v967, %v959
        %v1048 = vpack.c.b16 %v968, %v960
        %v1049 = vpack.c.b16 %v977, %v969
        %v1050 = vpack.c.b16 %v978, %v970
        %v1051 = vpack.c.b16 %v979, %v971
        %v1052 = vpack.c.b16 %v980, %v972
        %v1053 = vpack.c.b16 %v981, %v973
        %v1054 = vpack.c.b16 %v982, %v974
        %v1055 = vpack.c.b16 %v983, %v975
        %v1056 = vpack.c.b16 %v984, %v976
        %v1057 = vpack.c.b16 %v993, %v985
        %v1058 = vpack.c.b16 %v994, %v986
        %v1059 = vpack.c.b16 %v995, %v987
        %v1060 = vpack.c.b16 %v996, %v988
        %v1061 = vpack.c.b16 %v997, %v989
        %v1062 = vpack.c.b16 %v998, %v990
        %v1063 = vpack.c.b16 %v999, %v991
        %v1064 = vpack.c.b16 %v1000, %v992
        %1129 = vmatprep.subr.bf16.mxu0 %v1002
        %1130 = vmatpush1.bf16.msra.mxu0 %v1001
        %1131 = vmatprep.subr.bf16.mxu0 %v1010
        %1132 = vmatpush1.bf16.msra.mxu0 %v1009
        %1133 = vmatprep.subr.bf16.mxu0 %v1018
        %1134 = vmatpush1.bf16.msra.mxu0 %v1017
        %1135 = vmatprep.subr.bf16.mxu0 %v1026
        %1136 = vmatpush1.bf16.msra.mxu0 %v1025
        %1137 = vmatprep.subr.bf16.mxu0 %v1034
        %1138 = vmatpush1.bf16.msra.mxu0 %v1033
        %1139 = vmatprep.subr.bf16.mxu0 %v1042
        %1140 = vmatpush1.bf16.msra.mxu0 %v1041
        %1141 = vmatprep.subr.bf16.mxu0 %v1050
        %1142 = vmatpush1.bf16.msra.mxu0 %v1049
        %1143 = vmatprep.subr.bf16.mxu0 %v1058
        %1144 = vmatpush1.bf16.msra.mxu0 %v1057
        %1145 = vmatprep.subr.bf16.mxu0 0
        %1146 = vmatpush1.bf16.msra.mxu0 0
        %1147 = vmatprep.subr.bf16.mxu0 0
        %1148 = vmatpush1.bf16.msra.mxu0 0
        %1149 = vmatprep.subr.bf16.mxu0 0
        %1150 = vmatpush1.bf16.msra.mxu0 0
        %1151 = vmatprep.subr.bf16.mxu0 0
        %1152 = vmatpush1.bf16.msra.mxu0 0
        %1153 = vmatprep.subr.bf16.mxu0 0
        %1154 = vmatpush1.bf16.msra.mxu0 0
        %1155 = vmatprep.subr.bf16.mxu0 0
        %1156 = vmatpush1.bf16.msra.mxu0 0
        %1157 = vmatprep.subr.bf16.mxu0 0
        %1158 = vmatpush1.bf16.msra.mxu0 0
        %1159 = vmatprep.subr.bf16.mxu0 0
        %1160 = vmatpush1.bf16.msra.mxu0 0
        %1161 = vmatprep.mubr.bf16.mxu0 0
        %1162 = vmatmul.mubr.bf16.gmra.mrb[0].mxu0 %v737
        %v1163 = vpop.f32.mrb[0].mxu0
        %v1164 = vadd.f32 0.0, %v1163
        %v1165 = vpop.f32.mrb[0].mxu0
        %v1166 = vadd.f32 0.0, %v1165
        %v1167 = vpop.f32.mrb[0].mxu0
        %v1168 = vadd.f32 0.0, %v1167
        %v1169 = vpop.f32.mrb[0].mxu0
        %v1170 = vadd.f32 0.0, %v1169
        %1171 = vmatprep.mubr.bf16.mxu0 0
        %1172 = vmatmul.mubr.bf16.gmra.mrb[0].mxu0 %v738
        %v1173 = vpop.f32.mrb[0].mxu0
        %v1174 = vadd.f32 0.0, %v1173
        %v1175 = vpop.f32.mrb[0].mxu0
        %v1176 = vadd.f32 0.0, %v1175
        %v1177 = vpop.f32.mrb[0].mxu0
        %v1178 = vadd.f32 0.0, %v1177
        %v1179 = vpop.f32.mrb[0].mxu0
        %v1180 = vadd.f32 0.0, %v1179
        %1181 = vmatprep.mubr.bf16.mxu0 0
        %1182 = vmatmul.mubr.bf16.gmra.mrb[0].mxu0 %v739
        %v1183 = vpop.f32.mrb[0].mxu0
        %v1184 = vadd.f32 0.0, %v1183
        %v1185 = vpop.f32.mrb[0].mxu0
        %v1186 = vadd.f32 0.0, %v1185
        %v1187 = vpop.f32.mrb[0].mxu0
        %v1188 = vadd.f32 0.0, %v1187
        %v1189 = vpop.f32.mrb[0].mxu0
        %v1190 = vadd.f32 0.0, %v1189
        %1191 = vmatprep.mubr.bf16.mxu0 0
        %1192 = vmatmul.mubr.bf16.gmra.mrb[0].mxu0 %v740
        %v1193 = vpop.f32.mrb[0].mxu0
        %v1194 = vadd.f32 0.0, %v1193
        %v1195 = vpop.f32.mrb[0].mxu0
        %v1196 = vadd.f32 0.0, %v1195
        %v1197 = vpop.f32.mrb[0].mxu0
        %v1198 = vadd.f32 0.0, %v1197
        %v1199 = vpop.f32.mrb[0].mxu0
        %v1200 = vadd.f32 0.0, %v1199
        %1201 = vmatprep.mubr.bf16.mxu0 0
        %1202 = vmatmul.mubr.bf16.gmra.mrb[0].mxu0 %v741
        %v1203 = vpop.f32.mrb[0].mxu0
        %v1204 = vadd.f32 0.0, %v1203
        %v1205 = vpop.f32.mrb[0].mxu0
        %v1206 = vadd.f32 0.0, %v1205
        %v1207 = vpop.f32.mrb[0].mxu0
        %v1208 = vadd.f32 0.0, %v1207
        %v1209 = vpop.f32.mrb[0].mxu0
        %v1210 = vadd.f32 0.0, %v1209
        %1211 = vmatprep.mubr.bf16.mxu0 0
        %1212 = vmatmul.mubr.bf16.gmra.mrb[0].mxu0 %v742
        %v1213 = vpop.f32.mrb[0].mxu0
        %v1214 = vadd.f32 0.0, %v1213
        %v1215 = vpop.f32.mrb[0].mxu0
        %v1216 = vadd.f32 0.0, %v1215
        %v1217 = vpop.f32.mrb[0].mxu0
        %v1218 = vadd.f32 0.0, %v1217
        %v1219 = vpop.f32.mrb[0].mxu0
        %v1220 = vadd.f32 0.0, %v1219
        %1221 = vmatprep.mubr.bf16.mxu0 0
        %1222 = vmatmul.mubr.bf16.gmra.mrb[0].mxu0 %v743
        %v1223 = vpop.f32.mrb[0].mxu0
        %v1224 = vadd.f32 0.0, %v1223
        %v1225 = vpop.f32.mrb[0].mxu0
        %v1226 = vadd.f32 0.0, %v1225
        %v1227 = vpop.f32.mrb[0].mxu0
        %v1228 = vadd.f32 0.0, %v1227
        %v1229 = vpop.f32.mrb[0].mxu0
        %v1230 = vadd.f32 0.0, %v1229
        %1231 = vmatprep.mubr.bf16.mxu0 0
        %1232 = vmatmul.mubr.bf16.gmra.mrb[0].mxu0 %v744
        %v1233 = vpop.f32.mrb[0].mxu0
        %v1234 = vadd.f32 0.0, %v1233
        %v1235 = vpop.f32.mrb[0].mxu0
        %v1236 = vadd.f32 0.0, %v1235
        %v1237 = vpop.f32.mrb[0].mxu0
        %v1238 = vadd.f32 0.0, %v1237
        %v1239 = vpop.f32.mrb[0].mxu0
        %v1240 = vadd.f32 0.0, %v1239
        %1241 = vdwg.mxu0
        %1242 = vmatprep.subr.bf16.mxu0 %v1004
        %1243 = vmatpush1.bf16.msra.mxu0 %v1003
        %1244 = vmatprep.subr.bf16.mxu0 %v1012
        %1245 = vmatpush1.bf16.msra.mxu0 %v1011
        %1246 = vmatprep.subr.bf16.mxu0 %v1020
        %1247 = vmatpush1.bf16.msra.mxu0 %v1019
        %1248 = vmatprep.subr.bf16.mxu0 %v1028
        %1249 = vmatpush1.bf16.msra.mxu0 %v1027
        %1250 = vmatprep.subr.bf16.mxu0 %v1036
        %1251 = vmatpush1.bf16.msra.mxu0 %v1035
        %1252 = vmatprep.subr.bf16.mxu0 %v1044
        %1253 = vmatpush1.bf16.msra.mxu0 %v1043
        %1254 = vmatprep.subr.bf16.mxu0 %v1052
        %1255 = vmatpush1.bf16.msra.mxu0 %v1051
        %1256 = vmatprep.subr.bf16.mxu0 %v1060
        %1257 = vmatpush1.bf16.msra.mxu0 %v1059
        %1258 = vmatprep.subr.bf16.mxu0 0
        %1259 = vmatpush1.bf16.msra.mxu0 0
        %1260 = vmatprep.subr.bf16.mxu0 0
        %1261 = vmatpush1.bf16.msra.mxu0 0
        %1262 = vmatprep.subr.bf16.mxu0 0
        %1263 = vmatpush1.bf16.msra.mxu0 0
        %1264 = vmatprep.subr.bf16.mxu0 0
        %1265 = vmatpush1.bf16.msra.mxu0 0
        %1266 = vmatprep.subr.bf16.mxu0 0
        %1267 = vmatpush1.bf16.msra.mxu0 0
        %1268 = vmatprep.subr.bf16.mxu0 0
        %1269 = vmatpush1.bf16.msra.mxu0 0
        %1270 = vmatprep.subr.bf16.mxu0 0
        %1271 = vmatpush1.bf16.msra.mxu0 0
        %1272 = vmatprep.subr.bf16.mxu0 0
        %1273 = vmatpush1.bf16.msra.mxu0 0
        %1274 = vmatprep.mubr.bf16.mxu0 0
        %1275 = vmatmul.mubr.bf16.gmra.mrb[0].mxu0 %v737
        %v1276 = vpop.f32.mrb[0].mxu0
        %v1277 = vadd.f32 0.0, %v1276
        %v1278 = vpop.f32.mrb[0].mxu0
        %v1279 = vadd.f32 0.0, %v1278
        %v1280 = vpop.f32.mrb[0].mxu0
        %v1281 = vadd.f32 0.0, %v1280
        %v1282 = vpop.f32.mrb[0].mxu0
        %v1283 = vadd.f32 0.0, %v1282
        %1284 = vmatprep.mubr.bf16.mxu0 0
        %1285 = vmatmul.mubr.bf16.gmra.mrb[0].mxu0 %v738
        %v1286 = vpop.f32.mrb[0].mxu0
        %v1287 = vadd.f32 0.0, %v1286
        %v1288 = vpop.f32.mrb[0].mxu0
        %v1289 = vadd.f32 0.0, %v1288
        %v1290 = vpop.f32.mrb[0].mxu0
        %v1291 = vadd.f32 0.0, %v1290
        %v1292 = vpop.f32.mrb[0].mxu0
        %v1293 = vadd.f32 0.0, %v1292
        %1294 = vmatprep.mubr.bf16.mxu0 0
        %1295 = vmatmul.mubr.bf16.gmra.mrb[0].mxu0 %v739
        %v1296 = vpop.f32.mrb[0].mxu0
        %v1297 = vadd.f32 0.0, %v1296
        %v1298 = vpop.f32.mrb[0].mxu0
        %v1299 = vadd.f32 0.0, %v1298
        %v1300 = vpop.f32.mrb[0].mxu0
        %v1301 = vadd.f32 0.0, %v1300
        %v1302 = vpop.f32.mrb[0].mxu0
        %v1303 = vadd.f32 0.0, %v1302
        %1304 = vmatprep.mubr.bf16.mxu0 0
        %1305 = vmatmul.mubr.bf16.gmra.mrb[0].mxu0 %v740
        %v1306 = vpop.f32.mrb[0].mxu0
        %v1307 = vadd.f32 0.0, %v1306
        %v1308 = vpop.f32.mrb[0].mxu0
        %v1309 = vadd.f32 0.0, %v1308
        %v1310 = vpop.f32.mrb[0].mxu0
        %v1311 = vadd.f32 0.0, %v1310
        %v1312 = vpop.f32.mrb[0].mxu0
        %v1313 = vadd.f32 0.0, %v1312
        %1314 = vmatprep.mubr.bf16.mxu0 0
        %1315 = vmatmul.mubr.bf16.gmra.mrb[0].mxu0 %v741
        %v1316 = vpop.f32.mrb[0].mxu0
        %v1317 = vadd.f32 0.0, %v1316
        %v1318 = vpop.f32.mrb[0].mxu0
        %v1319 = vadd.f32 0.0, %v1318
        %v1320 = vpop.f32.mrb[0].mxu0
        %v1321 = vadd.f32 0.0, %v1320
        %v1322 = vpop.f32.mrb[0].mxu0
        %v1323 = vadd.f32 0.0, %v1322
        %1324 = vmatprep.mubr.bf16.mxu0 0
        %1325 = vmatmul.mubr.bf16.gmra.mrb[0].mxu0 %v742
        %v1326 = vpop.f32.mrb[0].mxu0
        %v1327 = vadd.f32 0.0, %v1326
        %v1328 = vpop.f32.mrb[0].mxu0
        %v1329 = vadd.f32 0.0, %v1328
        %v1330 = vpop.f32.mrb[0].mxu0
        %v1331 = vadd.f32 0.0, %v1330
        %v1332 = vpop.f32.mrb[0].mxu0
        %v1333 = vadd.f32 0.0, %v1332
        %1334 = vmatprep.mubr.bf16.mxu0 0
        %1335 = vmatmul.mubr.bf16.gmra.mrb[0].mxu0 %v743
        %v1336 = vpop.f32.mrb[0].mxu0
        %v1337 = vadd.f32 0.0, %v1336
        %v1338 = vpop.f32.mrb[0].mxu0
        %v1339 = vadd.f32 0.0, %v1338
        %v1340 = vpop.f32.mrb[0].mxu0
        %v1341 = vadd.f32 0.0, %v1340
        %v1342 = vpop.f32.mrb[0].mxu0
        %v1343 = vadd.f32 0.0, %v1342
        %1344 = vmatprep.mubr.bf16.mxu0 0
        %1345 = vmatmul.mubr.bf16.gmra.mrb[0].mxu0 %v744
        %v1346 = vpop.f32.mrb[0].mxu0
        %v1347 = vadd.f32 0.0, %v1346
        %v1348 = vpop.f32.mrb[0].mxu0
        %v1349 = vadd.f32 0.0, %v1348
        %v1350 = vpop.f32.mrb[0].mxu0
        %v1351 = vadd.f32 0.0, %v1350
        %v1352 = vpop.f32.mrb[0].mxu0
        %v1353 = vadd.f32 0.0, %v1352
        %1354 = vdwg.mxu0
        %1355 = vmatprep.subr.bf16.mxu0 %v1006
        %1356 = vmatpush1.bf16.msra.mxu0 %v1005
        %1357 = vmatprep.subr.bf16.mxu0 %v1014
        %1358 = vmatpush1.bf16.msra.mxu0 %v1013
        %1359 = vmatprep.subr.bf16.mxu0 %v1022
        %1360 = vmatpush1.bf16.msra.mxu0 %v1021
        %1361 = vmatprep.subr.bf16.mxu0 %v1030
        %1362 = vmatpush1.bf16.msra.mxu0 %v1029
        %1363 = vmatprep.subr.bf16.mxu0 %v1038
        %1364 = vmatpush1.bf16.msra.mxu0 %v1037
        %1365 = vmatprep.subr.bf16.mxu0 %v1046
        %1366 = vmatpush1.bf16.msra.mxu0 %v1045
        %1367 = vmatprep.subr.bf16.mxu0 %v1054
        %1368 = vmatpush1.bf16.msra.mxu0 %v1053
        %1369 = vmatprep.subr.bf16.mxu0 %v1062
        %1370 = vmatpush1.bf16.msra.mxu0 %v1061
        %1371 = vmatprep.subr.bf16.mxu0 0
        %1372 = vmatpush1.bf16.msra.mxu0 0
        %1373 = vmatprep.subr.bf16.mxu0 0
        %1374 = vmatpush1.bf16.msra.mxu0 0
        %1375 = vmatprep.subr.bf16.mxu0 0
        %1376 = vmatpush1.bf16.msra.mxu0 0
        %1377 = vmatprep.subr.bf16.mxu0 0
        %1378 = vmatpush1.bf16.msra.mxu0 0
        %1379 = vmatprep.subr.bf16.mxu0 0
        %1380 = vmatpush1.bf16.msra.mxu0 0
        %1381 = vmatprep.subr.bf16.mxu0 0
        %1382 = vmatpush1.bf16.msra.mxu0 0
        %1383 = vmatprep.subr.bf16.mxu0 0
        %1384 = vmatpush1.bf16.msra.mxu0 0
        %1385 = vmatprep.subr.bf16.mxu0 0
        %1386 = vmatpush1.bf16.msra.mxu0 0
        %1387 = vmatprep.mubr.bf16.mxu0 0
        %1388 = vmatmul.mubr.bf16.gmra.mrb[0].mxu0 %v737
        %v1389 = vpop.f32.mrb[0].mxu0
        %v1390 = vadd.f32 0.0, %v1389
        %v1391 = vpop.f32.mrb[0].mxu0
        %v1392 = vadd.f32 0.0, %v1391
        %v1393 = vpop.f32.mrb[0].mxu0
        %v1394 = vadd.f32 0.0, %v1393
        %v1395 = vpop.f32.mrb[0].mxu0
        %v1396 = vadd.f32 0.0, %v1395
        %1397 = vmatprep.mubr.bf16.mxu0 0
        %1398 = vmatmul.mubr.bf16.gmra.mrb[0].mxu0 %v738
        %v1399 = vpop.f32.mrb[0].mxu0
        %v1400 = vadd.f32 0.0, %v1399
        %v1401 = vpop.f32.mrb[0].mxu0
        %v1402 = vadd.f32 0.0, %v1401
        %v1403 = vpop.f32.mrb[0].mxu0
        %v1404 = vadd.f32 0.0, %v1403
        %v1405 = vpop.f32.mrb[0].mxu0
        %v1406 = vadd.f32 0.0, %v1405
        %1407 = vmatprep.mubr.bf16.mxu0 0
        %1408 = vmatmul.mubr.bf16.gmra.mrb[0].mxu0 %v739
        %v1409 = vpop.f32.mrb[0].mxu0
        %v1410 = vadd.f32 0.0, %v1409
        %v1411 = vpop.f32.mrb[0].mxu0
        %v1412 = vadd.f32 0.0, %v1411
        %v1413 = vpop.f32.mrb[0].mxu0
        %v1414 = vadd.f32 0.0, %v1413
        %v1415 = vpop.f32.mrb[0].mxu0
        %v1416 = vadd.f32 0.0, %v1415
        %1417 = vmatprep.mubr.bf16.mxu0 0
        %1418 = vmatmul.mubr.bf16.gmra.mrb[0].mxu0 %v740
        %v1419 = vpop.f32.mrb[0].mxu0
        %v1420 = vadd.f32 0.0, %v1419
        %v1421 = vpop.f32.mrb[0].mxu0
        %v1422 = vadd.f32 0.0, %v1421
        %v1423 = vpop.f32.mrb[0].mxu0
        %v1424 = vadd.f32 0.0, %v1423
        %v1425 = vpop.f32.mrb[0].mxu0
        %v1426 = vadd.f32 0.0, %v1425
        %1427 = vmatprep.mubr.bf16.mxu0 0
        %1428 = vmatmul.mubr.bf16.gmra.mrb[0].mxu0 %v741
        %v1429 = vpop.f32.mrb[0].mxu0
        %v1430 = vadd.f32 0.0, %v1429
        %v1431 = vpop.f32.mrb[0].mxu0
        %v1432 = vadd.f32 0.0, %v1431
        %v1433 = vpop.f32.mrb[0].mxu0
        %v1434 = vadd.f32 0.0, %v1433
        %v1435 = vpop.f32.mrb[0].mxu0
        %v1436 = vadd.f32 0.0, %v1435
        %1437 = vmatprep.mubr.bf16.mxu0 0
        %1438 = vmatmul.mubr.bf16.gmra.mrb[0].mxu0 %v742
        %v1439 = vpop.f32.mrb[0].mxu0
        %v1440 = vadd.f32 0.0, %v1439
        %v1441 = vpop.f32.mrb[0].mxu0
        %v1442 = vadd.f32 0.0, %v1441
        %v1443 = vpop.f32.mrb[0].mxu0
        %v1444 = vadd.f32 0.0, %v1443
        %v1445 = vpop.f32.mrb[0].mxu0
        %v1446 = vadd.f32 0.0, %v1445
        %1447 = vmatprep.mubr.bf16.mxu0 0
        %1448 = vmatmul.mubr.bf16.gmra.mrb[0].mxu0 %v743
        %v1449 = vpop.f32.mrb[0].mxu0
        %v1450 = vadd.f32 0.0, %v1449
        %v1451 = vpop.f32.mrb[0].mxu0
        %v1452 = vadd.f32 0.0, %v1451
        %v1453 = vpop.f32.mrb[0].mxu0
        %v1454 = vadd.f32 0.0, %v1453
        %v1455 = vpop.f32.mrb[0].mxu0
        %v1456 = vadd.f32 0.0, %v1455
        %1457 = vmatprep.mubr.bf16.mxu0 0
        %1458 = vmatmul.mubr.bf16.gmra.mrb[0].mxu0 %v744
        %v1459 = vpop.f32.mrb[0].mxu0
        %v1460 = vadd.f32 0.0, %v1459
        %v1461 = vpop.f32.mrb[0].mxu0
        %v1462 = vadd.f32 0.0, %v1461
        %v1463 = vpop.f32.mrb[0].mxu0
        %v1464 = vadd.f32 0.0, %v1463
        %v1465 = vpop.f32.mrb[0].mxu0
        %v1466 = vadd.f32 0.0, %v1465
        %1467 = vdwg.mxu0
        %1468 = vmatprep.subr.bf16.mxu0 %v1008
        %1469 = vmatpush1.bf16.msra.mxu0 %v1007
        %1470 = vmatprep.subr.bf16.mxu0 %v1016
        %1471 = vmatpush1.bf16.msra.mxu0 %v1015
        %1472 = vmatprep.subr.bf16.mxu0 %v1024
        %1473 = vmatpush1.bf16.msra.mxu0 %v1023
        %1474 = vmatprep.subr.bf16.mxu0 %v1032
        %1475 = vmatpush1.bf16.msra.mxu0 %v1031
        %1476 = vmatprep.subr.bf16.mxu0 %v1040
        %1477 = vmatpush1.bf16.msra.mxu0 %v1039
        %1478 = vmatprep.subr.bf16.mxu0 %v1048
        %1479 = vmatpush1.bf16.msra.mxu0 %v1047
        %1480 = vmatprep.subr.bf16.mxu0 %v1056
        %1481 = vmatpush1.bf16.msra.mxu0 %v1055
        %1482 = vmatprep.subr.bf16.mxu0 %v1064
        %1483 = vmatpush1.bf16.msra.mxu0 %v1063
        %1484 = vmatprep.subr.bf16.mxu0 0
        %1485 = vmatpush1.bf16.msra.mxu0 0
        %1486 = vmatprep.subr.bf16.mxu0 0
        %1487 = vmatpush1.bf16.msra.mxu0 0
        %1488 = vmatprep.subr.bf16.mxu0 0
        %1489 = vmatpush1.bf16.msra.mxu0 0
        %1490 = vmatprep.subr.bf16.mxu0 0
        %1491 = vmatpush1.bf16.msra.mxu0 0
        %1492 = vmatprep.subr.bf16.mxu0 0
        %1493 = vmatpush1.bf16.msra.mxu0 0
        %1494 = vmatprep.subr.bf16.mxu0 0
        %1495 = vmatpush1.bf16.msra.mxu0 0
        %1496 = vmatprep.subr.bf16.mxu0 0
        %1497 = vmatpush1.bf16.msra.mxu0 0
        %1498 = vmatprep.subr.bf16.mxu0 0
        %1499 = vmatpush1.bf16.msra.mxu0 0
        %1500 = vmatprep.mubr.bf16.mxu0 0
        %1501 = vmatmul.mubr.bf16.gmra.mrb[0].mxu0 %v737
        %v1502 = vpop.f32.mrb[0].mxu0
        %v1503 = vadd.f32 0.0, %v1502
        %v1504 = vpop.f32.mrb[0].mxu0
        %v1505 = vadd.f32 0.0, %v1504
        %v1506 = vpop.f32.mrb[0].mxu0
        %v1507 = vadd.f32 0.0, %v1506
        %v1508 = vpop.f32.mrb[0].mxu0
        %v1509 = vadd.f32 0.0, %v1508
        %1510 = vmatprep.mubr.bf16.mxu0 0
        %1511 = vmatmul.mubr.bf16.gmra.mrb[0].mxu0 %v738
        %v1512 = vpop.f32.mrb[0].mxu0
        %v1513 = vadd.f32 0.0, %v1512
        %v1514 = vpop.f32.mrb[0].mxu0
        %v1515 = vadd.f32 0.0, %v1514
        %v1516 = vpop.f32.mrb[0].mxu0
        %v1517 = vadd.f32 0.0, %v1516
        %v1518 = vpop.f32.mrb[0].mxu0
        %v1519 = vadd.f32 0.0, %v1518
        %1520 = vmatprep.mubr.bf16.mxu0 0
        %1521 = vmatmul.mubr.bf16.gmra.mrb[0].mxu0 %v739
        %v1522 = vpop.f32.mrb[0].mxu0
        %v1523 = vadd.f32 0.0, %v1522
        %v1524 = vpop.f32.mrb[0].mxu0
        %v1525 = vadd.f32 0.0, %v1524
        %v1526 = vpop.f32.mrb[0].mxu0
        %v1527 = vadd.f32 0.0, %v1526
        %v1528 = vpop.f32.mrb[0].mxu0
        %v1529 = vadd.f32 0.0, %v1528
        %1530 = vmatprep.mubr.bf16.mxu0 0
        %1531 = vmatmul.mubr.bf16.gmra.mrb[0].mxu0 %v740
        %v1532 = vpop.f32.mrb[0].mxu0
        %v1533 = vadd.f32 0.0, %v1532
        %v1534 = vpop.f32.mrb[0].mxu0
        %v1535 = vadd.f32 0.0, %v1534
        %v1536 = vpop.f32.mrb[0].mxu0
        %v1537 = vadd.f32 0.0, %v1536
        %v1538 = vpop.f32.mrb[0].mxu0
        %v1539 = vadd.f32 0.0, %v1538
        %1540 = vmatprep.mubr.bf16.mxu0 0
        %1541 = vmatmul.mubr.bf16.gmra.mrb[0].mxu0 %v741
        %v1542 = vpop.f32.mrb[0].mxu0
        %v1543 = vadd.f32 0.0, %v1542
        %v1544 = vpop.f32.mrb[0].mxu0
        %v1545 = vadd.f32 0.0, %v1544
        %v1546 = vpop.f32.mrb[0].mxu0
        %v1547 = vadd.f32 0.0, %v1546
        %v1548 = vpop.f32.mrb[0].mxu0
        %v1549 = vadd.f32 0.0, %v1548
        %1550 = vmatprep.mubr.bf16.mxu0 0
        %1551 = vmatmul.mubr.bf16.gmra.mrb[0].mxu0 %v742
        %v1552 = vpop.f32.mrb[0].mxu0
        %v1553 = vadd.f32 0.0, %v1552
        %v1554 = vpop.f32.mrb[0].mxu0
        %v1555 = vadd.f32 0.0, %v1554
        %v1556 = vpop.f32.mrb[0].mxu0
        %v1557 = vadd.f32 0.0, %v1556
        %v1558 = vpop.f32.mrb[0].mxu0
        %v1559 = vadd.f32 0.0, %v1558
        %1560 = vmatprep.mubr.bf16.mxu0 0
        %1561 = vmatmul.mubr.bf16.gmra.mrb[0].mxu0 %v743
        %v1562 = vpop.f32.mrb[0].mxu0
        %v1563 = vadd.f32 0.0, %v1562
        %v1564 = vpop.f32.mrb[0].mxu0
        %v1565 = vadd.f32 0.0, %v1564
        %v1566 = vpop.f32.mrb[0].mxu0
        %v1567 = vadd.f32 0.0, %v1566
        %v1568 = vpop.f32.mrb[0].mxu0
        %v1569 = vadd.f32 0.0, %v1568
        %1570 = vmatprep.mubr.bf16.mxu0 0
        %1571 = vmatmul.mubr.bf16.gmra.mrb[0].mxu0 %v744
        %v1572 = vpop.f32.mrb[0].mxu0
        %v1573 = vadd.f32 0.0, %v1572
        %v1574 = vpop.f32.mrb[0].mxu0
        %v1575 = vadd.f32 0.0, %v1574
        %v1576 = vpop.f32.mrb[0].mxu0
        %v1577 = vadd.f32 0.0, %v1576
        %v1578 = vpop.f32.mrb[0].mxu0
        %v1579 = vadd.f32 0.0, %v1578
        %1580 = vdwg.mxu0
        %v1581 = vmax.f32 %v1164, %v1168
        %v1582 = vmax.f32 %v1581, %v1174
        %v1583 = vmax.f32 %v1582, %v1178
        %v1584 = vmax.f32 %v1583, %v1184
        %v1585 = vmax.f32 %v1584, %v1188
        %v1586 = vmax.f32 %v1585, %v1194
        %v1587 = vmax.f32 %v1586, %v1198
        %v1588 = vmax.f32 %v1587, %v1204
        %v1589 = vmax.f32 %v1588, %v1208
        %v1590 = vmax.f32 %v1589, %v1214
        %v1591 = vmax.f32 %v1590, %v1218
        %v1592 = vmax.f32 %v1591, %v1224
        %v1593 = vmax.f32 %v1592, %v1228
        %v1594 = vmax.f32 %v1593, %v1234
        %v1595 = vmax.f32 %v1594, %v1238
        %v1596 = vmax.f32 %v1166, %v1170
        %v1597 = vmax.f32 %v1596, %v1176
        %v1598 = vmax.f32 %v1597, %v1180
        %v1599 = vmax.f32 %v1598, %v1186
        %v1600 = vmax.f32 %v1599, %v1190
        %v1601 = vmax.f32 %v1600, %v1196
        %v1602 = vmax.f32 %v1601, %v1200
        %v1603 = vmax.f32 %v1602, %v1206
        %v1604 = vmax.f32 %v1603, %v1210
        %v1605 = vmax.f32 %v1604, %v1216
        %v1606 = vmax.f32 %v1605, %v1220
        %v1607 = vmax.f32 %v1606, %v1226
        %v1608 = vmax.f32 %v1607, %v1230
        %v1609 = vmax.f32 %v1608, %v1236
        %v1610 = vmax.f32 %v1609, %v1240
        %v1611 = vmax.f32 %v1277, %v1281
        %v1612 = vmax.f32 %v1611, %v1287
        %v1613 = vmax.f32 %v1612, %v1291
        %v1614 = vmax.f32 %v1613, %v1297
        %v1615 = vmax.f32 %v1614, %v1301
        %v1616 = vmax.f32 %v1615, %v1307
        %v1617 = vmax.f32 %v1616, %v1311
        %v1618 = vmax.f32 %v1617, %v1317
        %v1619 = vmax.f32 %v1618, %v1321
        %v1620 = vmax.f32 %v1619, %v1327
        %v1621 = vmax.f32 %v1620, %v1331
        %v1622 = vmax.f32 %v1621, %v1337
        %v1623 = vmax.f32 %v1622, %v1341
        %v1624 = vmax.f32 %v1623, %v1347
        %v1625 = vmax.f32 %v1624, %v1351
        %v1626 = vmax.f32 %v1279, %v1283
        %v1627 = vmax.f32 %v1626, %v1289
        %v1628 = vmax.f32 %v1627, %v1293
        %v1629 = vmax.f32 %v1628, %v1299
        %v1630 = vmax.f32 %v1629, %v1303
        %v1631 = vmax.f32 %v1630, %v1309
        %v1632 = vmax.f32 %v1631, %v1313
        %v1633 = vmax.f32 %v1632, %v1319
        %v1634 = vmax.f32 %v1633, %v1323
        %v1635 = vmax.f32 %v1634, %v1329
        %v1636 = vmax.f32 %v1635, %v1333
        %v1637 = vmax.f32 %v1636, %v1339
        %v1638 = vmax.f32 %v1637, %v1343
        %v1639 = vmax.f32 %v1638, %v1349
        %v1640 = vmax.f32 %v1639, %v1353
        %v1641 = vmax.f32 %v1390, %v1394
        %v1642 = vmax.f32 %v1641, %v1400
        %v1643 = vmax.f32 %v1642, %v1404
        %v1644 = vmax.f32 %v1643, %v1410
        %v1645 = vmax.f32 %v1644, %v1414
        %v1646 = vmax.f32 %v1645, %v1420
        %v1647 = vmax.f32 %v1646, %v1424
        %v1648 = vmax.f32 %v1647, %v1430
        %v1649 = vmax.f32 %v1648, %v1434
        %v1650 = vmax.f32 %v1649, %v1440
        %v1651 = vmax.f32 %v1650, %v1444
        %v1652 = vmax.f32 %v1651, %v1450
        %v1653 = vmax.f32 %v1652, %v1454
        %v1654 = vmax.f32 %v1653, %v1460
        %v1655 = vmax.f32 %v1654, %v1464
        %v1656 = vmax.f32 %v1392, %v1396
        %v1657 = vmax.f32 %v1656, %v1402
        %v1658 = vmax.f32 %v1657, %v1406
        %v1659 = vmax.f32 %v1658, %v1412
        %v1660 = vmax.f32 %v1659, %v1416
        %v1661 = vmax.f32 %v1660, %v1422
        %v1662 = vmax.f32 %v1661, %v1426
        %v1663 = vmax.f32 %v1662, %v1432
        %v1664 = vmax.f32 %v1663, %v1436
        %v1665 = vmax.f32 %v1664, %v1442
        %v1666 = vmax.f32 %v1665, %v1446
        %v1667 = vmax.f32 %v1666, %v1452
        %v1668 = vmax.f32 %v1667, %v1456
        %v1669 = vmax.f32 %v1668, %v1462
        %v1670 = vmax.f32 %v1669, %v1466
        %v1671 = vmax.f32 %v1503, %v1507
        %v1672 = vmax.f32 %v1671, %v1513
        %v1673 = vmax.f32 %v1672, %v1517
        %v1674 = vmax.f32 %v1673, %v1523
        %v1675 = vmax.f32 %v1674, %v1527
        %v1676 = vmax.f32 %v1675, %v1533
        %v1677 = vmax.f32 %v1676, %v1537
        %v1678 = vmax.f32 %v1677, %v1543
        %v1679 = vmax.f32 %v1678, %v1547
        %v1680 = vmax.f32 %v1679, %v1553
        %v1681 = vmax.f32 %v1680, %v1557
        %v1682 = vmax.f32 %v1681, %v1563
        %v1683 = vmax.f32 %v1682, %v1567
        %v1684 = vmax.f32 %v1683, %v1573
        %v1685 = vmax.f32 %v1684, %v1577
        %v1686 = vmax.f32 %v1505, %v1509
        %v1687 = vmax.f32 %v1686, %v1515
        %v1688 = vmax.f32 %v1687, %v1519
        %v1689 = vmax.f32 %v1688, %v1525
        %v1690 = vmax.f32 %v1689, %v1529
        %v1691 = vmax.f32 %v1690, %v1535
        %v1692 = vmax.f32 %v1691, %v1539
        %v1693 = vmax.f32 %v1692, %v1545
        %v1694 = vmax.f32 %v1693, %v1549
        %v1695 = vmax.f32 %v1694, %v1555
        %v1696 = vmax.f32 %v1695, %v1559
        %v1697 = vmax.f32 %v1696, %v1565
        %v1698 = vmax.f32 %v1697, %v1569
        %v1699 = vmax.f32 %v1698, %v1575
        %v1700 = vmax.f32 %v1699, %v1579
        %p1701 = scmp.eq.s32.totalorder %s28, 0
        // Predicated region
        $region65: #{tpu_custom_call.1} parent=47 // pred_check
          %p1702 = pneg %p1701
        $region66: #{tpu_custom_call.1} parent=47 // pred_check_branch
          %1704 = sbr.rel (%p1702) target = $region68
        $region67: #{tpu_custom_call.1} parent=47 // pred_region
          %1705 = vst [vmem:[#allocation2] sm:$0xff] %v1595
          %1706 = vst [vmem:[#allocation2 + $0x8] sm:$0xff] %v1610
          %1707 = vst [vmem:[#allocation2 + $0x10] sm:$0xff] %v1625
          %1708 = vst [vmem:[#allocation2 + $0x18] sm:$0xff] %v1640
          %1709 = vst [vmem:[#allocation2 + $0x20] sm:$0xff] %v1655
          %1710 = vst [vmem:[#allocation2 + $0x28] sm:$0xff] %v1670
          %1711 = vst [vmem:[#allocation2 + $0x30] sm:$0xff] %v1685
          %1712 = vst [vmem:[#allocation2 + $0x38] sm:$0xff] %v1700
        $region68: #{tpu_custom_call.1} parent=47 // pred_fallthru
          _
        %p1713 = scmp.gt.s32.totalorder %s28, 0
        // Predicated region
        $region69: #{tpu_custom_call.1} parent=47 // pred_check
          %p1714 = pneg %p1713
        $region70: #{tpu_custom_call.1} parent=47 // pred_check_branch
          %1716 = sbr.rel (%p1714) target = $region72
        $region71: #{tpu_custom_call.1} parent=47 // pred_region
          %v1717 = vld [vmem:[#allocation2] sm:$0xff]
          %v1718 = vld [vmem:[#allocation2 + $0x8] sm:$0xff]
          %v1719 = vld [vmem:[#allocation2 + $0x10] sm:$0xff]
          %v1720 = vld [vmem:[#allocation2 + $0x18] sm:$0xff]
          %v1721 = vld [vmem:[#allocation2 + $0x20] sm:$0xff]
          %v1722 = vld [vmem:[#allocation2 + $0x28] sm:$0xff]
          %v1723 = vld [vmem:[#allocation2 + $0x30] sm:$0xff]
          %v1724 = vld [vmem:[#allocation2 + $0x38] sm:$0xff]
          %v1725 = vmax.f32 %v1717, %v1595
          %v1726 = vmax.f32 %v1718, %v1610
          %v1727 = vmax.f32 %v1719, %v1625
          %v1728 = vmax.f32 %v1720, %v1640
          %v1729 = vmax.f32 %v1721, %v1655
          %v1730 = vmax.f32 %v1722, %v1670
          %v1731 = vmax.f32 %v1723, %v1685
          %v1732 = vmax.f32 %v1724, %v1700
          %1733 = vst [vmem:[#allocation2] sm:$0xff] %v1725
          %1734 = vst [vmem:[#allocation2 + $0x8] sm:$0xff] %v1726
          %1735 = vst [vmem:[#allocation2 + $0x10] sm:$0xff] %v1727
          %1736 = vst [vmem:[#allocation2 + $0x18] sm:$0xff] %v1728
          %1737 = vst [vmem:[#allocation2 + $0x20] sm:$0xff] %v1729
          %1738 = vst [vmem:[#allocation2 + $0x28] sm:$0xff] %v1730
          %1739 = vst [vmem:[#allocation2 + $0x30] sm:$0xff] %v1731
          %1740 = vst [vmem:[#allocation2 + $0x38] sm:$0xff] %v1732
        $region72: #{tpu_custom_call.1} parent=47 // pred_fallthru
          _
        // Predicated region
        $region73: #{tpu_custom_call.1} parent=47 // pred_check
          %p1741 = pneg %p1701
        $region74: #{tpu_custom_call.1} parent=47 // pred_check_branch
          %1743 = sbr.rel (%p1741) target = $region76
        $region75: #{tpu_custom_call.1} parent=47 // pred_region
          %v1744 = vld [vmem:[#allocation2] sm:$0xff]
          %v1745 = vld [vmem:[#allocation2 + $0x8] sm:$0xff]
          %v1746 = vld [vmem:[#allocation2 + $0x10] sm:$0xff]
          %v1747 = vld [vmem:[#allocation2 + $0x18] sm:$0xff]
          %v1748 = vld [vmem:[#allocation2 + $0x20] sm:$0xff]
          %v1749 = vld [vmem:[#allocation2 + $0x28] sm:$0xff]
          %v1750 = vld [vmem:[#allocation2 + $0x30] sm:$0xff]
          %v1751 = vld [vmem:[#allocation2 + $0x38] sm:$0xff]
          %v1752 = vrot.slane %v1744, 4
          %v1753 = vmax.f32 %v1744, %v1752
          %v1754 = vrot.slane %v1753, 2
          %v1755 = vmax.f32 %v1753, %v1754
          %v1756 = vrot.slane %v1755, 1
          %v1757 = vmax.f32 %v1755, %v1756
          %v1758 = vrot.slane %v1745, 4
          %v1759 = vmax.f32 %v1745, %v1758
          %v1760 = vrot.slane %v1759, 2
          %v1761 = vmax.f32 %v1759, %v1760
          %v1762 = vrot.slane %v1761, 1
          %v1763 = vmax.f32 %v1761, %v1762
          %v1764 = vrot.slane %v1746, 4
          %v1765 = vmax.f32 %v1746, %v1764
          %v1766 = vrot.slane %v1765, 2
          %v1767 = vmax.f32 %v1765, %v1766
          %v1768 = vrot.slane %v1767, 1
          %v1769 = vmax.f32 %v1767, %v1768
          %v1770 = vrot.slane %v1747, 4
          %v1771 = vmax.f32 %v1747, %v1770
          %v1772 = vrot.slane %v1771, 2
          %v1773 = vmax.f32 %v1771, %v1772
          %v1774 = vrot.slane %v1773, 1
          %v1775 = vmax.f32 %v1773, %v1774
          %v1776 = vrot.slane %v1748, 4
          %v1777 = vmax.f32 %v1748, %v1776
          %v1778 = vrot.slane %v1777, 2
          %v1779 = vmax.f32 %v1777, %v1778
          %v1780 = vrot.slane %v1779, 1
          %v1781 = vmax.f32 %v1779, %v1780
          %v1782 = vrot.slane %v1749, 4
          %v1783 = vmax.f32 %v1749, %v1782
          %v1784 = vrot.slane %v1783, 2
          %v1785 = vmax.f32 %v1783, %v1784
          %v1786 = vrot.slane %v1785, 1
          %v1787 = vmax.f32 %v1785, %v1786
          %v1788 = vrot.slane %v1750, 4
          %v1789 = vmax.f32 %v1750, %v1788
          %v1790 = vrot.slane %v1789, 2
          %v1791 = vmax.f32 %v1789, %v1790
          %v1792 = vrot.slane %v1791, 1
          %v1793 = vmax.f32 %v1791, %v1792
          %v1794 = vrot.slane %v1751, 4
          %v1795 = vmax.f32 %v1751, %v1794
          %v1796 = vrot.slane %v1795, 2
          %v1797 = vmax.f32 %v1795, %v1796
          %v1798 = vrot.slane %v1797, 1
          %v1799 = vmax.f32 %v1797, %v1798
          %v1800 = vld [vmem:[%s6] sm:$0xff]
          %v1802 = vlaneseq
          %v1803 = vshrl.u32 %v1802, 7
          %v1804 = vsub.s32 0, %v1803
          %v1805 = vrot.slane %v1800, %v1804
          %v1806 = vlaneseq
          %v1807 = vshrl.u32 %v1806, 7
          %v1808 = vsub.s32 1, %v1807
          %v1809 = vrot.slane %v1800, %v1808
          %v1810 = vlaneseq
          %v1811 = vshrl.u32 %v1810, 7
          %v1812 = vsub.s32 2, %v1811
          %v1813 = vrot.slane %v1800, %v1812
          %v1814 = vlaneseq
          %v1815 = vshrl.u32 %v1814, 7
          %v1816 = vsub.s32 3, %v1815
          %v1817 = vrot.slane %v1800, %v1816
          %v1818 = vlaneseq
          %v1819 = vshrl.u32 %v1818, 7
          %v1820 = vsub.s32 4, %v1819
          %v1821 = vrot.slane %v1800, %v1820
          %v1822 = vlaneseq
          %v1823 = vshrl.u32 %v1822, 7
          %v1824 = vsub.s32 5, %v1823
          %v1825 = vrot.slane %v1800, %v1824
          %v1826 = vlaneseq
          %v1827 = vshrl.u32 %v1826, 7
          %v1828 = vsub.s32 6, %v1827
          %v1829 = vrot.slane %v1800, %v1828
          %v1830 = vlaneseq
          %v1831 = vshrl.u32 %v1830, 7
          %v1832 = vsub.s32 7, %v1831
          %v1833 = vrot.slane %v1800, %v1832
          %v1842 = vadd.f32 %v1757, %v1805
          %v1843 = vadd.f32 %v1763, %v1809
          %v1844 = vadd.f32 %v1769, %v1813
          %v1845 = vadd.f32 %v1775, %v1817
          %v1846 = vadd.f32 %v1781, %v1821
          %v1847 = vadd.f32 %v1787, %v1825
          %v1848 = vadd.f32 %v1793, %v1829
          %v1849 = vadd.f32 %v1799, %v1833
          %v1850 = vmax.f32 %v1842, 0.0
          %v1851 = vmax.f32 %v1843, 0.0
          %v1852 = vmax.f32 %v1844, 0.0
          %v1853 = vmax.f32 %v1845, 0.0
          %v1854 = vmax.f32 %v1846, 0.0
          %v1855 = vmax.f32 %v1847, 0.0
          %v1856 = vmax.f32 %v1848, 0.0
          %v1857 = vmax.f32 %v1849, 0.0
          %v1858 = vpack.c.bf16 %v1850, %v1850
          %v1859 = vpack.c.bf16 %v1851, %v1851
          %v1860 = vpack.c.bf16 %v1852, %v1852
          %v1861 = vpack.c.bf16 %v1853, %v1853
          %v1862 = vpack.c.bf16 %v1854, %v1854
          %v1863 = vpack.c.bf16 %v1855, %v1855
          %v1864 = vpack.c.bf16 %v1856, %v1856
          %v1865 = vpack.c.bf16 %v1857, %v1857
          %v1874 = vcombine.low %v1858, %v1859
          %v1875 = vcombine.low %v1860, %v1861
          %v1876 = vcombine.low %v1862, %v1863
          %v1877 = vcombine.low %v1864, %v1865
          %v1879 = vunpack.c.l.s4 1966171168
          %v1880 = vunpack.c.0.s8 %v1879
          %v1881 = vlaneseq
          %v1882 = vshrl.u32 %v1881, 7
          %v1883 = vsub.s32 %v1880, %v1882
          %v1884 = vrot.slane %v1874, %v1883
          %v1886 = vunpack.c.l.s4 1966171168
          %v1887 = vunpack.c.0.s8 %v1886
          %v1888 = vlaneseq
          %v1889 = vshrl.u32 %v1888, 7
          %v1890 = vsub.s32 %v1887, %v1889
          %v1891 = vrot.slane %v1875, %v1890
          %v1893 = vunpack.c.l.s4 1966171168
          %v1894 = vunpack.c.0.s8 %v1893
          %v1895 = vlaneseq
          %v1896 = vshrl.u32 %v1895, 7
          %v1897 = vsub.s32 %v1894, %v1896
          %v1898 = vrot.slane %v1876, %v1897
          %v1900 = vunpack.c.l.s4 1966171168
          %v1901 = vunpack.c.0.s8 %v1900
          %v1902 = vlaneseq
          %v1903 = vshrl.u32 %v1902, 7
          %v1904 = vsub.s32 %v1901, %v1903
          %v1905 = vrot.slane %v1877, %v1904
          %v1906 = vcombine.low %v1884, %v1891
          %v1907 = vcombine.low %v1898, %v1905
          %v1909 = vunpack.c.l.s4 1966171168
          %v1910 = vunpack.c.0.s8 %v1909
          %v1911 = vlaneseq
          %v1912 = vshrl.u32 %v1911, 7
          %v1913 = vsub.s32 %v1910, %v1912
          %v1914 = vrot.slane %v1906, %v1913
          %v1916 = vunpack.c.l.s4 1966171168
          %v1917 = vunpack.c.0.s8 %v1916
          %v1918 = vlaneseq
          %v1919 = vshrl.u32 %v1918, 7
          %v1920 = vsub.s32 %v1917, %v1919
          %v1921 = vrot.slane %v1907, %v1920
          %v1922 = vcombine.low %v1914, %v1921
          %vm1924 = vcmask 1040384
          %vm1925 = vsmask.f32 256
          %vm1926 = vmand %vm1924, %vm1925
          %vm1927 = vcmask 1041409
          %vm1928 = vsmask.f32 1280
          %vm1929 = vmand %vm1927, %vm1928
          %vm1930 = vmor %vm1929, %vm1926
          %vm1931 = vcmask 1042434
          %vm1932 = vsmask.f32 2304
          %vm1933 = vmand %vm1931, %vm1932
          %vm1934 = vmor %vm1933, %vm1930
          %vm1935 = vcmask 1043459
          %vm1936 = vsmask.f32 3328
          %vm1937 = vmand %vm1935, %vm1936
          %vm1938 = vmor %vm1937, %vm1934
          %vm1939 = vcmask 1044484
          %vm1940 = vsmask.f32 4352
          %vm1941 = vmand %vm1939, %vm1940
          %vm1942 = vmor %vm1941, %vm1938
          %vm1943 = vcmask 1045509
          %vm1944 = vsmask.f32 5376
          %vm1945 = vmand %vm1943, %vm1944
          %vm1946 = vmor %vm1945, %vm1942
          %vm1947 = vcmask 1046534
          %vm1948 = vsmask.f32 6400
          %vm1949 = vmand %vm1947, %vm1948
          %vm1950 = vmor %vm1949, %vm1946
          %vm1951 = vcmask 1047559
          %vm1952 = vsmask.f32 7424
          %vm1953 = vmand %vm1951, %vm1952
          %vm1954 = vmor %vm1953, %vm1950
          %v1955 = vld [vmem:[%s355] sm:$0xff]
          %v1956 = vsel %vm1954, %v1922, %v1955
          %1957 = vst [vmem:[%s355] sm:$0xff] %v1956
        $region76: #{tpu_custom_call.1} parent=47 // pred_fallthru
          _
        %p1958 = scmp.lt.s32.totalorder %s27, 1
        %s1959 = scalar_select %p1958, %s27, 1
        %s1960 = smul.addr %s1959, 8
        %s1961 = scalar_lea.vmem %s7, %s1960
        // Predicated region
        $region77: #{tpu_custom_call.1} parent=47 // pred_check
          %p1962 = pneg %p207
        $region78: #{tpu_custom_call.1} parent=47 // pred_check_branch
          %1964 = sbr.rel (%p1962) target = $region80
        $region79: #{tpu_custom_call.1} parent=47 // pred_region
          _
        $region80: #{tpu_custom_call.1} parent=47 // pred_fallthru
          _
      $region48: #{tpu_custom_call.1} parent=5 // pred_fallthru
        _
      %p1965 = scmp.le.s32.totalorder 2, %s18
      // Predicated region
      $region81: #{tpu_custom_call.1} parent=5 // pred_check
        %p1966 = pneg %p1965
      $region82: #{tpu_custom_call.1} parent=5 // pred_check_branch
        %1968 = sbr.rel (%p1966) target = $region84
      $region83: #{tpu_custom_call.1} parent=5 // pred_region
        %s1969 = ssub.s32 %s18, 2
        // Predicated region
        $region85: #{tpu_custom_call.1} parent=83 // pred_check
          %p1970 = pneg %p213
        $region86: #{tpu_custom_call.1} parent=83 // pred_check_branch
          %1972 = sbr.rel (%p1970) target = $region88
        $region87: #{tpu_custom_call.1} parent=83 // pred_region
          %p1973 = scmp.lt.s32.totalorder %s29, 1
          %s1974 = scalar_select %p1973, %s29, 1
          %s1975 = smul.addr %s1974, 8
          %s1976 = scalar_lea.vmem %s7, %s1975
        $region88: #{tpu_custom_call.1} parent=83 // pred_fallthru
          _
      $region84: #{tpu_custom_call.1} parent=5 // pred_fallthru
        _
    $region6: #{tpu_custom_call.1} parent=1 // loop_footer
      %s22 = sadd.s32 1, %s18
    $region7: #{tpu_custom_call.1} parent=1 // loop_footer_branch
      %17 = sbr.rel target = $region3
    $region8: #{tpu_custom_call.1} parent=1 // loop_exit
      _
    %1977 = vsyncpa [#allocation4], 1
    %s1978 = scalar_lea.sflag [#allocation4], 1
    %1979 = vsyncpa %s1978, 1
    %1980 = vsyncpa [#allocation6], 1
    %1981 = vsyncpa [#allocation9], 1

</llo_original>
